<compile_context>
chip_gen: v7x
topology: tpu7x:2x2x1
jax: 0.10.0
libtpu: 0.0.40
codegen_flags: <defaults>
</compile_context>

<pallas_src>
import math

import jax
import jax.numpy as jnp
import numpy as np
from jax.experimental import pallas as pl
from jax.experimental.pallas import tpu as pltpu

VMEM = pltpu.MemorySpace.VMEM
NEG_BIG = -1e30


def decoder_attr_kernel(
    # activations
    emb_ref,        # [B, 2H]   cat(embed_act, embed_attr); dropout = identity (eval)
    s_ref,          # [L, B, H] GRU hidden state (L == 2 hard-coded here)
    enc_ref,        # [B, S, H] encoder output, batch-major
    mask_bias_ref,  # [B, 1, S] additive mask bias (0.0 keep / -1e30 drop)
    # attention params ([in, out] layout; K projection folded into the query)
    wq_ref, bq_ref,  # [H, H], [1, H]
    wkT_ref,         # [H, H] = wk.T   (bk dropped: per-row constant, cancels in softmax)
    # GRU layer 0 (input = cat(emb_act, emb_attr, c); weights fused along K)
    wih0_ref, whh0_ref, bih0_ref, bhh0_ref,   # [3H,3H], [H,3H], [1,3H], [1,3H]
    # GRU layer 1
    wih1_ref, whh1_ref, bih1_ref, bhh1_ref,   # [H,3H], [H,3H], [1,3H], [1,3H]
    # fc_out fused over cat(dec_output, c, emb_act, emb_attr), lane-padded to Dpad
    wfc_ref, bfc_ref,    # [4H, Dpad], [1, Dpad]
    # outputs
    pred_ref,       # [B, Dpad]  (wrapper slices to D)
    hidden_ref,     # [L, B, H]
):
    L, B, H = s_ref.shape
    f32 = jnp.float32

    emb = emb_ref[...]           # [B, 2H]
    s = s_ref[...]               # [L, B, H]
    enc = enc_ref[...]           # [B, S, H]

    # ---------------- Attention (dot-product, folded K projection) ----------
    s_mean = jnp.mean(s, axis=0)                                       # [B, H]
    q = jnp.dot(s_mean, wq_ref[...], preferred_element_type=f32) + bq_ref[...]
    qk = jnp.dot(q, wkT_ref[...], preferred_element_type=f32)          # [B, H]

    # batched MXU contractions (flash-attention style): [B,1,H] x [B,S,H] -> [B,1,S]
    scores = jnp.einsum('bqh,bsh->bqs', qk[:, None, :], enc,
                        preferred_element_type=f32)
    scores = scores * (1.0 / math.sqrt(H)) + mask_bias_ref[...]        # [B, 1, S]

    m = jnp.max(scores, axis=-1, keepdims=True)
    e = jnp.exp(scores - m)
    denom = jnp.sum(e, axis=-1, keepdims=True)
    probs = e * pl.reciprocal(denom, approx=True)                      # softmax(-1)

    c = jnp.einsum('bqs,bsh->bqh', probs, enc,
                   preferred_element_type=f32)[:, 0, :]                # [B, H]

    # ---------------- GRU (1 time step, 2 layers) ----------------
    def gru_cell(gi, gh, h):
        r = jax.nn.sigmoid(gi[:, 0:H] + gh[:, 0:H])
        z = jax.nn.sigmoid(gi[:, H:2 * H] + gh[:, H:2 * H])
        n = jnp.tanh(gi[:, 2 * H:3 * H] + r * gh[:, 2 * H:3 * H])
        return (1.0 - z) * n + z * h

    h0 = s[0]
    rnn_in = jnp.concatenate([emb, c], axis=-1)                        # [B, 3H]
    gi0 = jnp.dot(rnn_in, wih0_ref[...], preferred_element_type=f32) + bih0_ref[...]
    gh0 = jnp.dot(h0, whh0_ref[...], preferred_element_type=f32) + bhh0_ref[...]
    h0_new = gru_cell(gi0, gh0, h0)

    # dropout(0.3) between GRU layers: identity in eval mode
    h1 = s[1]
    gi1 = jnp.dot(h0_new, wih1_ref[...], preferred_element_type=f32) + bih1_ref[...]
    gh1 = jnp.dot(h1, whh1_ref[...], preferred_element_type=f32) + bhh1_ref[...]
    h1_new = gru_cell(gi1, gh1, h1)

    # ---------------- fc_out: single deep MXU push, K = 4H = 128 ------------
    fc_in = jnp.concatenate([h1_new, c, emb], axis=-1)                 # [B, 4H]
    pred = jnp.dot(fc_in, wfc_ref[...], preferred_element_type=f32) + bfc_ref[...]

    pred_ref[...] = pred                                               # lane-dense store
    hidden_ref[...] = jnp.stack([h0_new, h1_new], axis=0)              # single store


def init_params(key, vocab_size, hid_dim, output_dim):
    """Unfused parameters in [in, out] layout (used directly by the reference)."""
    H, D = hid_dim, output_dim
    ks = jax.random.split(key, 22)
    n = lambda k, shp: (jax.random.normal(k, shp, jnp.float32) * 0.1)
    return dict(
        emb_act=n(ks[0], (vocab_size, H)),
        emb_attr=n(ks[1], (D, H)),
        wq=n(ks[2], (H, H)), bq=n(ks[3], (1, H)),
        wk=n(ks[4], (H, H)), bk=n(ks[5], (1, H)),
        wih0_a=n(ks[6], (H, 3 * H)), wih0_b=n(ks[7], (H, 3 * H)),
        wih0_c=n(ks[8], (H, 3 * H)),
        whh0=n(ks[9], (H, 3 * H)), bih0=n(ks[10], (1, 3 * H)),
        bhh0=n(ks[11], (1, 3 * H)),
        wih1=n(ks[12], (H, 3 * H)), whh1=n(ks[13], (H, 3 * H)),
        bih1=n(ks[14], (1, 3 * H)), bhh1=n(ks[15], (1, 3 * H)),
        wfc_o=n(ks[16], (H, D)), wfc_c=n(ks[17], (H, D)),
        wfc_a=n(ks[18], (H, D)), wfc_b=n(ks[19], (H, D)),
        bfc=n(ks[20], (1, D)),
    )


def prepare_kernel_params(params):
    """One-time (outside the per-step hot loop) fusion / transpose / lane padding."""
    H = params["wq"].shape[0]
    D = params["wfc_o"].shape[1]
    Dpad = ((D + 127) // 128) * 128

    # fc_out weights fused along K in the order cat(dec_output, c, emb_act, emb_attr),
    # zero-padded on the output (lane) axis so the kernel store is lane-dense.
    wfc_full = jnp.concatenate(
        [params["wfc_o"], params["wfc_c"], params["wfc_a"], params["wfc_b"]], axis=0)
    wfc_pad = jnp.zeros((4 * H, Dpad), jnp.float32).at[:, :D].set(wfc_full)
    bfc_pad = jnp.zeros((1, Dpad), jnp.float32).at[:, :D].set(params["bfc"])

    return dict(
        emb_act=params["emb_act"], emb_attr=params["emb_attr"],
        wq=params["wq"], bq=params["bq"],
        wk_t=jnp.transpose(params["wk"]),       # folded K projection (bk cancels in softmax)
        wih0=jnp.concatenate(
            [params["wih0_a"], params["wih0_b"], params["wih0_c"]], axis=0),  # [3H, 3H]
        whh0=params["whh0"], bih0=params["bih0"], bhh0=params["bhh0"],
        wih1=params["wih1"], whh1=params["whh1"],
        bih1=params["bih1"], bhh1=params["bhh1"],
        wfc=wfc_pad, bfc=bfc_pad, out_dim=D,
    )


def decoder_attr_forward(kparams, dec_input_act, dec_input_attr, s, enc_output_bsh, mask):
    """Mirrors Decoder_attr.forward (TF_styles='FAP', eval mode).

    dec_input_act  : int32 [B]        activity token ids
    dec_input_attr : int32 [B]        attribute token ids
    s              : f32   [L, B, H]  GRU hidden (L = 2)
    enc_output_bsh : f32   [B, S, H]  encoder output, batch-major
                     (PyTorch's [S, B, H] should be transposed ONCE upstream)
    mask           : bool  [B, M]     with S == M * num_attr
    returns (pred [B, D], dec_hidden [L, B, H])
    """
    L, B, H = s.shape
    S = enc_output_bsh.shape[1]
    M = mask.shape[1]
    num_attr = S // M
    D = kparams["out_dim"]
    Dpad = kparams["wfc"].shape[1]

    # glue: embedding gathers + additive mask bias (both tiny, outside the kernel)
    emb_act = jnp.take(kparams["emb_act"], dec_input_act, axis=0)     # [B, H]
    emb_attr = jnp.take(kparams["emb_attr"], dec_input_attr, axis=0)  # [B, H]
    emb = jnp.concatenate([emb_act, emb_attr], axis=-1)               # [B, 2H]
    mask_tiled = jnp.tile(mask, (1, num_attr))                        # [B, S] bool
    mask_bias = jnp.where(mask_tiled, 0.0, NEG_BIG).astype(jnp.float32)[:, None, :]

    args = (
        emb, s, enc_output_bsh, mask_bias,
        kparams["wq"], kparams["bq"], kparams["wk_t"],
        kparams["wih0"], kparams["whh0"], kparams["bih0"], kparams["bhh0"],
        kparams["wih1"], kparams["whh1"], kparams["bih1"], kparams["bhh1"],
        kparams["wfc"], kparams["bfc"],
    )

    pred_pad, dec_hidden = pl.pallas_call(
        decoder_attr_kernel,
        out_shape=(
            jax.ShapeDtypeStruct((B, Dpad), jnp.float32),
            jax.ShapeDtypeStruct((L, B, H), jnp.float32),
        ),
        in_specs=[pl.BlockSpec(memory_space=VMEM)] * len(args),
        out_specs=(
            pl.BlockSpec(memory_space=VMEM),
            pl.BlockSpec(memory_space=VMEM),
        ),
    )(*args)
    return pred_pad[:, :D], dec_hidden


def reference_forward(params, dec_input_act, dec_input_attr, s, enc_bsh, mask):
    """Pure-JAX reference of the original module math (unfused params)."""
    L, B, H = s.shape
    S = enc_bsh.shape[1]
    M = mask.shape[1]
    num_attr = S // M

    emb_act = params["emb_act"][dec_input_act]
    emb_attr = params["emb_attr"][dec_input_attr]
    msk = jnp.tile(mask, (1, num_attr))                               # [B, S] bool

    q = s.mean(0) @ params["wq"] + params["bq"]
    k = enc_bsh @ params["wk"] + params["bk"]
    scores = jnp.einsum("bh,bsh->bs", q, k) / math.sqrt(H)
    scores = jnp.where(msk, scores, -jnp.inf)
    probs = jax.nn.softmax(scores, axis=-1)
    c = jnp.einsum("bs,bsh->bh", probs, enc_bsh)

    def cell(gi, gh, h):
        r = jax.nn.sigmoid(gi[:, :H] + gh[:, :H])
        z = jax.nn.sigmoid(gi[:, H:2 * H] + gh[:, H:2 * H])
        n = jnp.tanh(gi[:, 2 * H:] + r * gh[:, 2 * H:])
        return (1 - z) * n + z * h

    gi0 = (emb_act @ params["wih0_a"] + emb_attr @ params["wih0_b"]
           + c @ params["wih0_c"] + params["bih0"])
    gh0 = s[0] @ params["whh0"] + params["bhh0"]
    h0 = cell(gi0, gh0, s[0])
    gi1 = h0 @ params["wih1"] + params["bih1"]
    gh1 = s[1] @ params["whh1"] + params["bhh1"]
    h1 = cell(gi1, gh1, s[1])
    pred = (h1 @ params["wfc_o"] + c @ params["wfc_c"]
            + emb_act @ params["wfc_a"] + emb_attr @ params["wfc_b"]
            + params["bfc"])
    return pred, jnp.stack([h0, h1], axis=0)


if __name__ == "__main__":
    # small shapes consistent with the module
    vocab_size = 16
    hid_dim = 32          # H
    num_layers = 2        # L (kernel hard-codes 2 GRU layers)
    output_dim = 12       # D (attribute vocab)
    B = 8                 # batch
    M = 8                 # base mask length
    num_attr = 3
    S = M * num_attr      # encoder sequence length

    key = jax.random.PRNGKey(0)
    kp, k1, k2, k3, k4 = jax.random.split(key, 5)

    params = init_params(kp, vocab_size, hid_dim, output_dim)
    kparams = prepare_kernel_params(params)     # one-time weight fusion/transpose/pad

    dec_input_act = jax.random.randint(k1, (B,), 0, vocab_size, dtype=jnp.int32)
    dec_input_attr = jax.random.randint(k2, (B,), 0, output_dim, dtype=jnp.int32)
    s = jax.random.normal(k3, (num_layers, B, hid_dim), jnp.float32)
    enc_output_sbh = jax.random.normal(k4, (S, B, hid_dim), jnp.float32)
    # encoder output is made batch-major ONCE, outside the per-step hot path
    enc_output_bsh = jnp.transpose(enc_output_sbh, (1, 0, 2))            # [B, S, H]
    # at least one valid position per row so softmax is well-defined
    lengths = (jnp.arange(B, dtype=jnp.int32) % M) + 1
    mask = jnp.arange(M, dtype=jnp.int32)[None, :] < lengths[:, None]    # [B, M] bool

    pred, dec_hidden = decoder_attr_forward(
        kparams, dec_input_act, dec_input_attr, s, enc_output_bsh, mask)
    jax.block_until_ready((pred, dec_hidden))

    pred_ref, hidden_ref = reference_forward(
        params, dec_input_act, dec_input_attr, s, enc_output_bsh, mask)
    # tolerance covers the approx-EUP reciprocal and float re-association of the
    # folded K projection / fused matmuls
    np.testing.assert_allclose(np.asarray(pred), np.asarray(pred_ref),
                               atol=2e-3, rtol=2e-3)
    np.testing.assert_allclose(np.asarray(dec_hidden), np.asarray(hidden_ref),
                               atol=2e-3, rtol=2e-3)

    assert pred.shape == (B, output_dim)
    assert dec_hidden.shape == (num_layers, B, hid_dim)
    print("KERNEL_OK")
</pallas_src>

<mosaic_0001>
module attributes {stable_mosaic.version = 11 : i64} {
  func.func @decoder_attr_kernel(%arg0: memref<8x64xf32, #tpu.memory_space<vmem>>, %arg1: memref<2x8x32xf32, #tpu.memory_space<vmem>>, %arg2: memref<8x24x32xf32, #tpu.memory_space<vmem>>, %arg3: memref<8x1x24xf32, #tpu.memory_space<vmem>>, %arg4: memref<32x32xf32, #tpu.memory_space<vmem>>, %arg5: memref<1x32xf32, #tpu.memory_space<vmem>>, %arg6: memref<32x32xf32, #tpu.memory_space<vmem>>, %arg7: memref<96x96xf32, #tpu.memory_space<vmem>>, %arg8: memref<32x96xf32, #tpu.memory_space<vmem>>, %arg9: memref<1x96xf32, #tpu.memory_space<vmem>>, %arg10: memref<1x96xf32, #tpu.memory_space<vmem>>, %arg11: memref<32x96xf32, #tpu.memory_space<vmem>>, %arg12: memref<32x96xf32, #tpu.memory_space<vmem>>, %arg13: memref<1x96xf32, #tpu.memory_space<vmem>>, %arg14: memref<1x96xf32, #tpu.memory_space<vmem>>, %arg15: memref<128x128xf32, #tpu.memory_space<vmem>>, %arg16: memref<1x128xf32, #tpu.memory_space<vmem>>, %arg17: memref<8x128xf32, #tpu.memory_space<vmem>>, %arg18: memref<2x8x32xf32, #tpu.memory_space<vmem>>) attributes {dimension_semantics = [], scalar_prefetch = 0 : i64, scratch_operands = 0 : i64, tpu.core_type = #tpu.core_type<tc>} {
    %c0 = arith.constant 0 : index
    %c0_0 = arith.constant 0 : index
    %0 = vector.load %arg0[%c0, %c0_0] : memref<8x64xf32, #tpu.memory_space<vmem>>, vector<8x64xf32>
    %c0_1 = arith.constant 0 : index
    %c0_2 = arith.constant 0 : index
    %c0_3 = arith.constant 0 : index
    %1 = vector.load %arg1[%c0_1, %c0_2, %c0_3] : memref<2x8x32xf32, #tpu.memory_space<vmem>>, vector<2x8x32xf32>
    %c0_4 = arith.constant 0 : index
    %c0_5 = arith.constant 0 : index
    %c0_6 = arith.constant 0 : index
    %2 = vector.load %arg2[%c0_4, %c0_5, %c0_6] : memref<8x24x32xf32, #tpu.memory_space<vmem>>, vector<8x24x32xf32>
    %cst = arith.constant dense<0.000000e+00> : vector<8x32xf32>
    %3 = vector.multi_reduction <add>, %1, %cst [0] : vector<2x8x32xf32> to vector<8x32xf32>
    %cst_7 = arith.constant 2.000000e+00 : f32
    %4 = vector.broadcast %cst_7 : f32 to vector<8x32xf32>
    %5 = arith.divf %3, %4 : vector<8x32xf32>
    %c0_8 = arith.constant 0 : index
    %c0_9 = arith.constant 0 : index
    %6 = vector.load %arg4[%c0_8, %c0_9] : memref<32x32xf32, #tpu.memory_space<vmem>>, vector<32x32xf32>
    %cst_10 = arith.constant dense<0.000000e+00> : vector<8x32xf32>
    %7 = tpu.matmul %5, %6, %cst_10 {dimension_numbers = #tpu.dot_dimension_numbers<[1], [0], [0], [1], [0, 0, 1, 1], [], []>} : vector<8x32xf32>, vector<32x32xf32>, vector<8x32xf32> -> vector<8x32xf32>
    %c0_11 = arith.constant 0 : index
    %c0_12 = arith.constant 0 : index
    %8 = vector.load %arg5[%c0_11, %c0_12] : memref<1x32xf32, #tpu.memory_space<vmem>>, vector<1x32xf32>
    %9 = vector.broadcast %8 : vector<1x32xf32> to vector<8x32xf32>
    %10 = arith.addf %7, %9 : vector<8x32xf32>
    %c0_13 = arith.constant 0 : index
    %c0_14 = arith.constant 0 : index
    %11 = vector.load %arg6[%c0_13, %c0_14] : memref<32x32xf32, #tpu.memory_space<vmem>>, vector<32x32xf32>
    %cst_15 = arith.constant dense<0.000000e+00> : vector<8x32xf32>
    %12 = tpu.matmul %10, %11, %cst_15 {dimension_numbers = #tpu.dot_dimension_numbers<[1], [0], [0], [1], [0, 0, 1, 1], [], []>} : vector<8x32xf32>, vector<32x32xf32>, vector<8x32xf32> -> vector<8x32xf32>
    %13 = vector.shape_cast %12 : vector<8x32xf32> to vector<8x1x32xf32>
    "tpu.trace_start"() <{level = 10 : i32, message = "bqh,bsh->bqs"}> : () -> ()
    %cst_16 = arith.constant dense<0.000000e+00> : vector<8x1x24xf32>
    %14 = tpu.matmul %13, %2, %cst_16 {dimension_numbers = #tpu.dot_dimension_numbers<[2], [2], [1], [1], [0, 0, 0, 1, 1, 1], [0], [0]>} : vector<8x1x32xf32>, vector<8x24x32xf32>, vector<8x1x24xf32> -> vector<8x1x24xf32>
    "tpu.trace_stop"() : () -> ()
    %cst_17 = arith.constant 0.176776692 : f32
    %15 = vector.broadcast %cst_17 : f32 to vector<8x1x24xf32>
    %16 = arith.mulf %14, %15 : vector<8x1x24xf32>
    %c0_18 = arith.constant 0 : index
    %c0_19 = arith.constant 0 : index
    %c0_20 = arith.constant 0 : index
    %17 = vector.load %arg3[%c0_18, %c0_19, %c0_20] : memref<8x1x24xf32, #tpu.memory_space<vmem>>, vector<8x1x24xf32>
    %18 = arith.addf %16, %17 : vector<8x1x24xf32>
    %cst_21 = arith.constant dense<0xFF800000> : vector<8x1xf32>
    %19 = vector.multi_reduction <maximumf>, %18, %cst_21 [2] : vector<8x1x24xf32> to vector<8x1xf32>
    %20 = vector.shape_cast %19 : vector<8x1xf32> to vector<8x1x1xf32>
    %21 = vector.broadcast %20 : vector<8x1x1xf32> to vector<8x1x24xf32>
    %22 = arith.subf %18, %21 : vector<8x1x24xf32>
    %23 = math.exp %22 : vector<8x1x24xf32>
    %cst_22 = arith.constant dense<0.000000e+00> : vector<8x1xf32>
    %24 = vector.multi_reduction <add>, %23, %cst_22 [2] : vector<8x1x24xf32> to vector<8x1xf32>
    %25 = vector.shape_cast %24 : vector<8x1xf32> to vector<8x1x1xf32>
    %26 = tpu.reciprocal %25 {approx = true} : vector<8x1x1xf32> -> vector<8x1x1xf32>
    %27 = vector.broadcast %26 : vector<8x1x1xf32> to vector<8x1x24xf32>
    %28 = arith.mulf %23, %27 : vector<8x1x24xf32>
    "tpu.trace_start"() <{level = 10 : i32, message = "bqs,bsh->bqh"}> : () -> ()
    %cst_23 = arith.constant dense<0.000000e+00> : vector<8x1x32xf32>
    %29 = tpu.matmul %28, %2, %cst_23 {dimension_numbers = #tpu.dot_dimension_numbers<[2], [1], [1], [2], [0, 0, 0, 1, 1, 2], [0], [0]>} : vector<8x1x24xf32>, vector<8x24x32xf32>, vector<8x1x32xf32> -> vector<8x1x32xf32>
    "tpu.trace_stop"() : () -> ()
    %30 = vector.shape_cast %29 : vector<8x1x32xf32> to vector<8x32xf32>
    %31 = vector.extract_strided_slice %1 {offsets = [0, 0, 0], sizes = [1, 8, 32], strides = [1, 1, 1]} : vector<2x8x32xf32> to vector<1x8x32xf32>
    %32 = vector.shape_cast %31 : vector<1x8x32xf32> to vector<8x32xf32>
    %33 = tpu.concatenate %0, %30 in 1 : vector<8x64xf32>, vector<8x32xf32> -> vector<8x96xf32>
    %c0_24 = arith.constant 0 : index
    %c0_25 = arith.constant 0 : index
    %34 = vector.load %arg7[%c0_24, %c0_25] : memref<96x96xf32, #tpu.memory_space<vmem>>, vector<96x96xf32>
    %cst_26 = arith.constant dense<0.000000e+00> : vector<8x96xf32>
    %35 = tpu.matmul %33, %34, %cst_26 {dimension_numbers = #tpu.dot_dimension_numbers<[1], [0], [0], [1], [0, 0, 1, 1], [], []>} : vector<8x96xf32>, vector<96x96xf32>, vector<8x96xf32> -> vector<8x96xf32>
    %c0_27 = arith.constant 0 : index
    %c0_28 = arith.constant 0 : index
    %36 = vector.load %arg9[%c0_27, %c0_28] : memref<1x96xf32, #tpu.memory_space<vmem>>, vector<1x96xf32>
    %37 = vector.broadcast %36 : vector<1x96xf32> to vector<8x96xf32>
    %38 = arith.addf %35, %37 : vector<8x96xf32>
    %c0_29 = arith.constant 0 : index
    %c0_30 = arith.constant 0 : index
    %39 = vector.load %arg8[%c0_29, %c0_30] : memref<32x96xf32, #tpu.memory_space<vmem>>, vector<32x96xf32>
    %cst_31 = arith.constant dense<0.000000e+00> : vector<8x96xf32>
    %40 = tpu.matmul %32, %39, %cst_31 {dimension_numbers = #tpu.dot_dimension_numbers<[1], [0], [0], [1], [0, 0, 1, 1], [], []>} : vector<8x32xf32>, vector<32x96xf32>, vector<8x96xf32> -> vector<8x96xf32>
    %c0_32 = arith.constant 0 : index
    %c0_33 = arith.constant 0 : index
    %41 = vector.load %arg10[%c0_32, %c0_33] : memref<1x96xf32, #tpu.memory_space<vmem>>, vector<1x96xf32>
    %42 = vector.broadcast %41 : vector<1x96xf32> to vector<8x96xf32>
    %43 = arith.addf %40, %42 : vector<8x96xf32>
    %44 = vector.extract_strided_slice %38 {offsets = [0, 0], sizes = [8, 32], strides = [1, 1]} : vector<8x96xf32> to vector<8x32xf32>
    %45 = vector.extract_strided_slice %43 {offsets = [0, 0], sizes = [8, 32], strides = [1, 1]} : vector<8x96xf32> to vector<8x32xf32>
    %46 = arith.addf %44, %45 : vector<8x32xf32>
    %47 = arith.negf %46 : vector<8x32xf32>
    %48 = math.exp %47 : vector<8x32xf32>
    %cst_34 = arith.constant 1.000000e+00 : f32
    %49 = vector.broadcast %cst_34 : f32 to vector<8x32xf32>
    %50 = arith.addf %49, %48 : vector<8x32xf32>
    %51 = arith.divf %49, %50 : vector<8x32xf32>
    %52 = vector.extract_strided_slice %38 {offsets = [0, 32], sizes = [8, 32], strides = [1, 1]} : vector<8x96xf32> to vector<8x32xf32>
    %53 = vector.extract_strided_slice %43 {offsets = [0, 32], sizes = [8, 32], strides = [1, 1]} : vector<8x96xf32> to vector<8x32xf32>
    %54 = arith.addf %52, %53 : vector<8x32xf32>
    %55 = arith.negf %54 : vector<8x32xf32>
    %56 = math.exp %55 : vector<8x32xf32>
    %cst_35 = arith.constant 1.000000e+00 : f32
    %57 = vector.broadcast %cst_35 : f32 to vector<8x32xf32>
    %58 = arith.addf %57, %56 : vector<8x32xf32>
    %59 = arith.divf %57, %58 : vector<8x32xf32>
    %60 = vector.extract_strided_slice %38 {offsets = [0, 64], sizes = [8, 32], strides = [1, 1]} : vector<8x96xf32> to vector<8x32xf32>
    %61 = vector.extract_strided_slice %43 {offsets = [0, 64], sizes = [8, 32], strides = [1, 1]} : vector<8x96xf32> to vector<8x32xf32>
    %62 = arith.mulf %51, %61 : vector<8x32xf32>
    %63 = arith.addf %60, %62 : vector<8x32xf32>
    %64 = math.tanh %63 : vector<8x32xf32>
    %cst_36 = arith.constant 1.000000e+00 : f32
    %65 = vector.broadcast %cst_36 : f32 to vector<8x32xf32>
    %66 = arith.subf %65, %59 : vector<8x32xf32>
    %67 = arith.mulf %66, %64 : vector<8x32xf32>
    %68 = arith.mulf %59, %32 : vector<8x32xf32>
    %69 = arith.addf %67, %68 : vector<8x32xf32>
    %70 = vector.extract_strided_slice %1 {offsets = [1, 0, 0], sizes = [1, 8, 32], strides = [1, 1, 1]} : vector<2x8x32xf32> to vector<1x8x32xf32>
    %71 = vector.shape_cast %70 : vector<1x8x32xf32> to vector<8x32xf32>
    %c0_37 = arith.constant 0 : index
    %c0_38 = arith.constant 0 : index
    %72 = vector.load %arg11[%c0_37, %c0_38] : memref<32x96xf32, #tpu.memory_space<vmem>>, vector<32x96xf32>
    %cst_39 = arith.constant dense<0.000000e+00> : vector<8x96xf32>
    %73 = tpu.matmul %69, %72, %cst_39 {dimension_numbers = #tpu.dot_dimension_numbers<[1], [0], [0], [1], [0, 0, 1, 1], [], []>} : vector<8x32xf32>, vector<32x96xf32>, vector<8x96xf32> -> vector<8x96xf32>
    %c0_40 = arith.constant 0 : index
    %c0_41 = arith.constant 0 : index
    %74 = vector.load %arg13[%c0_40, %c0_41] : memref<1x96xf32, #tpu.memory_space<vmem>>, vector<1x96xf32>
    %75 = vector.broadcast %74 : vector<1x96xf32> to vector<8x96xf32>
    %76 = arith.addf %73, %75 : vector<8x96xf32>
    %c0_42 = arith.constant 0 : index
    %c0_43 = arith.constant 0 : index
    %77 = vector.load %arg12[%c0_42, %c0_43] : memref<32x96xf32, #tpu.memory_space<vmem>>, vector<32x96xf32>
    %cst_44 = arith.constant dense<0.000000e+00> : vector<8x96xf32>
    %78 = tpu.matmul %71, %77, %cst_44 {dimension_numbers = #tpu.dot_dimension_numbers<[1], [0], [0], [1], [0, 0, 1, 1], [], []>} : vector<8x32xf32>, vector<32x96xf32>, vector<8x96xf32> -> vector<8x96xf32>
    %c0_45 = arith.constant 0 : index
    %c0_46 = arith.constant 0 : index
    %79 = vector.load %arg14[%c0_45, %c0_46] : memref<1x96xf32, #tpu.memory_space<vmem>>, vector<1x96xf32>
    %80 = vector.broadcast %79 : vector<1x96xf32> to vector<8x96xf32>
    %81 = arith.addf %78, %80 : vector<8x96xf32>
    %82 = vector.extract_strided_slice %76 {offsets = [0, 0], sizes = [8, 32], strides = [1, 1]} : vector<8x96xf32> to vector<8x32xf32>
    %83 = vector.extract_strided_slice %81 {offsets = [0, 0], sizes = [8, 32], strides = [1, 1]} : vector<8x96xf32> to vector<8x32xf32>
    %84 = arith.addf %82, %83 : vector<8x32xf32>
    %85 = arith.negf %84 : vector<8x32xf32>
    %86 = math.exp %85 : vector<8x32xf32>
    %cst_47 = arith.constant 1.000000e+00 : f32
    %87 = vector.broadcast %cst_47 : f32 to vector<8x32xf32>
    %88 = arith.addf %87, %86 : vector<8x32xf32>
    %89 = arith.divf %87, %88 : vector<8x32xf32>
    %90 = vector.extract_strided_slice %76 {offsets = [0, 32], sizes = [8, 32], strides = [1, 1]} : vector<8x96xf32> to vector<8x32xf32>
    %91 = vector.extract_strided_slice %81 {offsets = [0, 32], sizes = [8, 32], strides = [1, 1]} : vector<8x96xf32> to vector<8x32xf32>
    %92 = arith.addf %90, %91 : vector<8x32xf32>
    %93 = arith.negf %92 : vector<8x32xf32>
    %94 = math.exp %93 : vector<8x32xf32>
    %cst_48 = arith.constant 1.000000e+00 : f32
    %95 = vector.broadcast %cst_48 : f32 to vector<8x32xf32>
    %96 = arith.addf %95, %94 : vector<8x32xf32>
    %97 = arith.divf %95, %96 : vector<8x32xf32>
    %98 = vector.extract_strided_slice %76 {offsets = [0, 64], sizes = [8, 32], strides = [1, 1]} : vector<8x96xf32> to vector<8x32xf32>
    %99 = vector.extract_strided_slice %81 {offsets = [0, 64], sizes = [8, 32], strides = [1, 1]} : vector<8x96xf32> to vector<8x32xf32>
    %100 = arith.mulf %89, %99 : vector<8x32xf32>
    %101 = arith.addf %98, %100 : vector<8x32xf32>
    %102 = math.tanh %101 : vector<8x32xf32>
    %cst_49 = arith.constant 1.000000e+00 : f32
    %103 = vector.broadcast %cst_49 : f32 to vector<8x32xf32>
    %104 = arith.subf %103, %97 : vector<8x32xf32>
    %105 = arith.mulf %104, %102 : vector<8x32xf32>
    %106 = arith.mulf %97, %71 : vector<8x32xf32>
    %107 = arith.addf %105, %106 : vector<8x32xf32>
    %108 = tpu.concatenate %107, %30, %0 in 1 : vector<8x32xf32>, vector<8x32xf32>, vector<8x64xf32> -> vector<8x128xf32>
    %c0_50 = arith.constant 0 : index
    %c0_51 = arith.constant 0 : index
    %109 = vector.load %arg15[%c0_50, %c0_51] : memref<128x128xf32, #tpu.memory_space<vmem>>, vector<128x128xf32>
    %cst_52 = arith.constant dense<0.000000e+00> : vector<8x128xf32>
    %110 = tpu.matmul %108, %109, %cst_52 {dimension_numbers = #tpu.dot_dimension_numbers<[1], [0], [0], [1], [0, 0, 1, 1], [], []>} : vector<8x128xf32>, vector<128x128xf32>, vector<8x128xf32> -> vector<8x128xf32>
    %c0_53 = arith.constant 0 : index
    %c0_54 = arith.constant 0 : index
    %111 = vector.load %arg16[%c0_53, %c0_54] : memref<1x128xf32, #tpu.memory_space<vmem>>, vector<1x128xf32>
    %112 = vector.broadcast %111 : vector<1x128xf32> to vector<8x128xf32>
    %113 = arith.addf %110, %112 : vector<8x128xf32>
    %c0_55 = arith.constant 0 : index
    %c0_56 = arith.constant 0 : index
    %114 = vector.load %arg17[%c0_55, %c0_56] : memref<8x128xf32, #tpu.memory_space<vmem>>, vector<8x128xf32>
    tpu.vector_store %arg17[%c0_55, %c0_56], %113 {strides = array<i32>} : memref<8x128xf32, #tpu.memory_space<vmem>>, vector<8x128xf32>,
    %115 = vector.shape_cast %69 : vector<8x32xf32> to vector<1x8x32xf32>
    %116 = vector.shape_cast %107 : vector<8x32xf32> to vector<1x8x32xf32>
    %117 = tpu.concatenate %115, %116 in 0 : vector<1x8x32xf32>, vector<1x8x32xf32> -> vector<2x8x32xf32>
    %c0_57 = arith.constant 0 : index
    %c0_58 = arith.constant 0 : index
    %c0_59 = arith.constant 0 : index
    %118 = vector.load %arg18[%c0_57, %c0_58, %c0_59] : memref<2x8x32xf32, #tpu.memory_space<vmem>>, vector<2x8x32xf32>
    tpu.vector_store %arg18[%c0_57, %c0_58, %c0_59], %117 {strides = array<i32>} : memref<2x8x32xf32, #tpu.memory_space<vmem>>, vector<2x8x32xf32>,
    return
  }
}

</mosaic_0001>

<llo_original>
// kernel: tpu_custom_call.1
$region0: #{tpu_custom_call.1}
  #allocation0 [shape = 'u32[]', space=smem, size = 0x4, offset = 0x4, fixed_abs, tag = 'smem constant byte address 0x4 - core index']
  #allocation1 [shape = 'u32[144,128]{1,0:T(1,128)}', space=vmem, size = 0x12000, scoped, tag = 'internal scratch']
  %s0 = inlined_call_operand.hbm [shape: f32[8,64], index: 0, kind: input, shape index: {}]
  %s1 = inlined_call_operand.hbm [shape: f32[2,8,32], index: 1, kind: input, shape index: {}]
  %s2 = inlined_call_operand.hbm [shape: f32[8,24,32], index: 2, kind: input, shape index: {}]
  %s3 = inlined_call_operand.vmem [shape: f32[8,1,24], index: 3, kind: input, shape index: {}]
  %s4 = inlined_call_operand.hbm [shape: f32[32,32], index: 4, kind: input, shape index: {}]
  %s5 = inlined_call_operand.vmem [shape: f32[1,32], index: 5, kind: input, shape index: {}]
  %s6 = inlined_call_operand.hbm [shape: f32[32,32], index: 6, kind: input, shape index: {}]
  %s7 = inlined_call_operand.hbm [shape: f32[96,96], index: 7, kind: input, shape index: {}]
  %s8 = inlined_call_operand.hbm [shape: f32[32,96], index: 8, kind: input, shape index: {}]
  %s9 = inlined_call_operand.hbm [shape: f32[1,96], index: 9, kind: input, shape index: {}]
  %s10 = inlined_call_operand.hbm [shape: f32[1,96], index: 10, kind: input, shape index: {}]
  %s11 = inlined_call_operand.vmem [shape: f32[32,96], index: 11, kind: input, shape index: {}]
  %s12 = inlined_call_operand.hbm [shape: f32[32,96], index: 12, kind: input, shape index: {}]
  %s13 = inlined_call_operand.vmem [shape: f32[1,96], index: 13, kind: input, shape index: {}]
  %s14 = inlined_call_operand.vmem [shape: f32[1,96], index: 14, kind: input, shape index: {}]
  %s15 = inlined_call_operand.hbm [shape: f32[128,128], index: 15, kind: input, shape index: {}]
  %s16 = inlined_call_operand.vmem [shape: f32[1,128], index: 16, kind: input, shape index: {}]
  %s17 = inlined_call_operand.hbm [shape: f32[8,128], index: 17, kind: output, shape index: {0}]
  %s18 = inlined_call_operand.hbm [shape: f32[2,8,32], index: 18, kind: output, shape index: {1}]
  %19 = xla_tuple %s17, %s18
  %s20 = sld [smem:[#allocation0]]
  $region130: #{tpu_custom_call.1} parent=0
    _
  %s22 = ssub.s32 1, %s20
  %s23 = scalar_select 0, %s22, %s20
  $region1: #{tpu_custom_call.1} parent=0
    #allocation2 [shape = 'u8[4096]{0}', space=vmem, size = 0x1000, scoped, tag = 'input window, operand 0, single buffered']
    #allocation3 [shape = 's32[1]{0}', space=sflag, size = 0x4, scoped, tag = 'scoped memory for tpu_custom_call.1']
    #allocation4 [shape = 's32[1]{0}', space=sflag, size = 0x4, scoped, tag = 'scoped memory for tpu_custom_call.1']
    #allocation5 [shape = 'u8[8192]{0}', space=vmem, size = 0x2000, scoped, tag = 'input window, operand 1, single buffered']
    #allocation6 [shape = 's32[1]{0}', space=sflag, size = 0x4, scoped, tag = 'scoped memory for tpu_custom_call.1']
    #allocation7 [shape = 'u8[98304]{0}', space=vmem, size = 0x18000, scoped, tag = 'input window, operand 2, single buffered']
    #allocation8 [shape = 'u8[16384]{0}', space=vmem, size = 0x4000, scoped, tag = 'input window, operand 4, single buffered']
    #allocation9 [shape = 's32[1]{0}', space=sflag, size = 0x4, scoped, tag = 'scoped memory for tpu_custom_call.1']
    #allocation10 [shape = 'u8[16384]{0}', space=vmem, size = 0x4000, scoped, tag = 'input window, operand 6, single buffered']
    #allocation11 [shape = 'u8[49152]{0}', space=vmem, size = 0xc000, scoped, tag = 'input window, operand 7, single buffered']
    #allocation12 [shape = 's32[1]{0}', space=sflag, size = 0x4, scoped, tag = 'scoped memory for tpu_custom_call.1']
    #allocation13 [shape = 'u8[16384]{0}', space=vmem, size = 0x4000, scoped, tag = 'input window, operand 8, single buffered']
    #allocation14 [shape = 'u8[512]{0}', space=vmem, size = 0x400, scoped, tag = 'input window, operand 9, single buffered']
    #allocation15 [shape = 's32[1]{0}', space=sflag, size = 0x4, scoped, tag = 'scoped memory for tpu_custom_call.1']
    #allocation16 [shape = 'u8[512]{0}', space=vmem, size = 0x400, scoped, tag = 'input window, operand 10, single buffered']
    #allocation17 [shape = 'u8[16384]{0}', space=vmem, size = 0x4000, scoped, tag = 'input window, operand 12, single buffered']
    #allocation18 [shape = 's32[1]{0}', space=sflag, size = 0x4, scoped, tag = 'scoped memory for tpu_custom_call.1']
    #allocation19 [shape = 'u8[65536]{0}', space=vmem, size = 0x10000, scoped, tag = 'input window, operand 15, single buffered']
    #allocation20 [shape = 'u8[4096]{0}', space=vmem, size = 0x1000, scoped, tag = 'output window, operand 0, single buffered']
    #allocation21 [shape = 'u8[8192]{0}', space=vmem, size = 0x2000, scoped, tag = 'output window, operand 1, single buffered']
    #allocation22 [shape = 's32[1]{0}', space=sflag, size = 0x4, scoped, tag = 'scoped memory for tpu_custom_call.1']
    %24 = vsyncpa [#allocation3], 0
    %25 = vsyncpa [#allocation6], 0
    %26 = vsyncpa [#allocation9], 0
    %27 = vsyncpa [#allocation12], 0
    %28 = vsyncpa [#allocation15], 0
    %29 = vsyncpa [#allocation18], 0
    %30 = vsyncpa [#allocation4], 0
    %31 = vsyncpa [#allocation22], 0
    // Predicated region
    $region2: #{tpu_custom_call.1} parent=1 // pred_check
      _
    $region3: #{tpu_custom_call.1} parent=1 // pred_check_branch
      %33 = sbr.rel (0) target = $region5
    $region4: #{tpu_custom_call.1} parent=1 // pred_region
      %s35 = ssub.s32 128, 128
      %36 = vsyncadd [#allocation3], %s35
      %s38 = sshll.u32 [#allocation2], 4
      %s39 = int_to_ptr.vmem [resolvable:$true] %s38
      %41 = dma.hbm_to_vmem [thread:$0]  %s0, 128, %s39, [#allocation3]
    $region5: #{tpu_custom_call.1} parent=1 // pred_fallthru
      _
    // Predicated region
    $region6: #{tpu_custom_call.1} parent=1 // pred_check
      _
    $region7: #{tpu_custom_call.1} parent=1 // pred_check_branch
      %43 = sbr.rel (0) target = $region9
    $region8: #{tpu_custom_call.1} parent=1 // pred_region
      %s45 = ssub.s32 256, 256
      %46 = vsyncadd [#allocation6], %s45
      %s47 = sshll.u32 [#allocation5], 4
      %s48 = int_to_ptr.vmem [resolvable:$true] %s47
      %53 = dma.hbm_to_vmem [thread:$0]  %s1, 256, %s48, [#allocation6], 128, 128, 8
    $region9: #{tpu_custom_call.1} parent=1 // pred_fallthru
      _
    // Predicated region
    $region10: #{tpu_custom_call.1} parent=1 // pred_check
      _
    $region11: #{tpu_custom_call.1} parent=1 // pred_check_branch
      %55 = sbr.rel (0) target = $region13
    $region12: #{tpu_custom_call.1} parent=1 // pred_region
      %s57 = ssub.s32 3072, 3072
      %58 = vsyncadd [#allocation6], %s57
      %s59 = sshll.u32 [#allocation7], 4
      %s60 = int_to_ptr.vmem [resolvable:$true] %s59
      %65 = dma.hbm_to_vmem [thread:$0]  %s2, 3072, %s60, [#allocation6], 128, 128, 8
    $region13: #{tpu_custom_call.1} parent=1 // pred_fallthru
      _
    // Predicated region
    $region14: #{tpu_custom_call.1} parent=1 // pred_check
      _
    $region15: #{tpu_custom_call.1} parent=1 // pred_check_branch
      %67 = sbr.rel (0) target = $region17
    $region16: #{tpu_custom_call.1} parent=1 // pred_region
      _
    $region17: #{tpu_custom_call.1} parent=1 // pred_fallthru
      _
    // Predicated region
    $region18: #{tpu_custom_call.1} parent=1 // pred_check
      _
    $region19: #{tpu_custom_call.1} parent=1 // pred_check_branch
      %69 = sbr.rel (0) target = $region21
    $region20: #{tpu_custom_call.1} parent=1 // pred_region
      %s71 = ssub.s32 512, 512
      %72 = vsyncadd [#allocation9], %s71
      %s73 = sshll.u32 [#allocation8], 4
      %s74 = int_to_ptr.vmem [resolvable:$true] %s73
      %79 = dma.hbm_to_vmem [thread:$0]  %s4, 512, %s74, [#allocation9], 128, 128, 8
    $region21: #{tpu_custom_call.1} parent=1 // pred_fallthru
      _
    // Predicated region
    $region22: #{tpu_custom_call.1} parent=1 // pred_check
      _
    $region23: #{tpu_custom_call.1} parent=1 // pred_check_branch
      %81 = sbr.rel (0) target = $region25
    $region24: #{tpu_custom_call.1} parent=1 // pred_region
      _
    $region25: #{tpu_custom_call.1} parent=1 // pred_fallthru
      _
    // Predicated region
    $region26: #{tpu_custom_call.1} parent=1 // pred_check
      _
    $region27: #{tpu_custom_call.1} parent=1 // pred_check_branch
      %83 = sbr.rel (0) target = $region29
    $region28: #{tpu_custom_call.1} parent=1 // pred_region
      %s85 = ssub.s32 512, 512
      %86 = vsyncadd [#allocation9], %s85
      %s87 = sshll.u32 [#allocation10], 4
      %s88 = int_to_ptr.vmem [resolvable:$true] %s87
      %93 = dma.hbm_to_vmem [thread:$0]  %s6, 512, %s88, [#allocation9], 128, 128, 8
    $region29: #{tpu_custom_call.1} parent=1 // pred_fallthru
      _
    // Predicated region
    $region30: #{tpu_custom_call.1} parent=1 // pred_check
      _
    $region31: #{tpu_custom_call.1} parent=1 // pred_check_branch
      %95 = sbr.rel (0) target = $region33
    $region32: #{tpu_custom_call.1} parent=1 // pred_region
      %s97 = ssub.s32 1536, 1536
      %98 = vsyncadd [#allocation12], %s97
      %s99 = sshll.u32 [#allocation11], 4
      %s100 = int_to_ptr.vmem [resolvable:$true] %s99
      %105 = dma.hbm_to_vmem [thread:$0]  %s7, 1536, %s100, [#allocation12], 128, 128, 8
    $region33: #{tpu_custom_call.1} parent=1 // pred_fallthru
      _
    // Predicated region
    $region34: #{tpu_custom_call.1} parent=1 // pred_check
      _
    $region35: #{tpu_custom_call.1} parent=1 // pred_check_branch
      %107 = sbr.rel (0) target = $region37
    $region36: #{tpu_custom_call.1} parent=1 // pred_region
      %s109 = ssub.s32 512, 512
      %110 = vsyncadd [#allocation12], %s109
      %s111 = sshll.u32 [#allocation13], 4
      %s112 = int_to_ptr.vmem [resolvable:$true] %s111
      %117 = dma.hbm_to_vmem [thread:$0]  %s8, 512, %s112, [#allocation12], 128, 128, 8
    $region37: #{tpu_custom_call.1} parent=1 // pred_fallthru
      _
    // Predicated region
    $region38: #{tpu_custom_call.1} parent=1 // pred_check
      _
    $region39: #{tpu_custom_call.1} parent=1 // pred_check_branch
      %119 = sbr.rel (0) target = $region41
    $region40: #{tpu_custom_call.1} parent=1 // pred_region
      %s121 = ssub.s32 16, 16
      %122 = vsyncadd [#allocation15], %s121
      %s124 = sshll.u32 [#allocation14], 4
      %s125 = int_to_ptr.vmem [resolvable:$true] %s124
      %127 = dma.hbm_to_vmem [thread:$0]  %s9, 16, %s125, [#allocation15]
    $region41: #{tpu_custom_call.1} parent=1 // pred_fallthru
      _
    // Predicated region
    $region42: #{tpu_custom_call.1} parent=1 // pred_check
      _
    $region43: #{tpu_custom_call.1} parent=1 // pred_check_branch
      %129 = sbr.rel (0) target = $region45
    $region44: #{tpu_custom_call.1} parent=1 // pred_region
      %s131 = ssub.s32 16, 16
      %132 = vsyncadd [#allocation15], %s131
      %s134 = sshll.u32 [#allocation16], 4
      %s135 = int_to_ptr.vmem [resolvable:$true] %s134
      %137 = dma.hbm_to_vmem [thread:$0]  %s10, 16, %s135, [#allocation15]
    $region45: #{tpu_custom_call.1} parent=1 // pred_fallthru
      _
    // Predicated region
    $region46: #{tpu_custom_call.1} parent=1 // pred_check
      _
    $region47: #{tpu_custom_call.1} parent=1 // pred_check_branch
      %139 = sbr.rel (0) target = $region49
    $region48: #{tpu_custom_call.1} parent=1 // pred_region
      _
    $region49: #{tpu_custom_call.1} parent=1 // pred_fallthru
      _
    // Predicated region
    $region50: #{tpu_custom_call.1} parent=1 // pred_check
      _
    $region51: #{tpu_custom_call.1} parent=1 // pred_check_branch
      %141 = sbr.rel (0) target = $region53
    $region52: #{tpu_custom_call.1} parent=1 // pred_region
      %s143 = ssub.s32 512, 512
      %144 = vsyncadd [#allocation18], %s143
      %s145 = sshll.u32 [#allocation17], 4
      %s146 = int_to_ptr.vmem [resolvable:$true] %s145
      %151 = dma.hbm_to_vmem [thread:$0]  %s12, 512, %s146, [#allocation18], 128, 128, 8
    $region53: #{tpu_custom_call.1} parent=1 // pred_fallthru
      _
    // Predicated region
    $region54: #{tpu_custom_call.1} parent=1 // pred_check
      _
    $region55: #{tpu_custom_call.1} parent=1 // pred_check_branch
      %153 = sbr.rel (0) target = $region57
    $region56: #{tpu_custom_call.1} parent=1 // pred_region
      _
    $region57: #{tpu_custom_call.1} parent=1 // pred_fallthru
      _
    // Predicated region
    $region58: #{tpu_custom_call.1} parent=1 // pred_check
      _
    $region59: #{tpu_custom_call.1} parent=1 // pred_check_branch
      %155 = sbr.rel (0) target = $region61
    $region60: #{tpu_custom_call.1} parent=1 // pred_region
      _
    $region61: #{tpu_custom_call.1} parent=1 // pred_fallthru
      _
    // Predicated region
    $region62: #{tpu_custom_call.1} parent=1 // pred_check
      _
    $region63: #{tpu_custom_call.1} parent=1 // pred_check_branch
      %157 = sbr.rel (0) target = $region65
    $region64: #{tpu_custom_call.1} parent=1 // pred_region
      %s159 = ssub.s32 2048, 2048
      %160 = vsyncadd [#allocation18], %s159
      %s161 = sshll.u32 [#allocation19], 4
      %s162 = int_to_ptr.vmem [resolvable:$true] %s161
      %167 = dma.hbm_to_vmem [thread:$0]  %s15, 2048, %s162, [#allocation18], 128, 128, 8
    $region65: #{tpu_custom_call.1} parent=1 // pred_fallthru
      _
    // Predicated region
    $region66: #{tpu_custom_call.1} parent=1 // pred_check
      _
    $region67: #{tpu_custom_call.1} parent=1 // pred_check_branch
      %169 = sbr.rel (0) target = $region69
    $region68: #{tpu_custom_call.1} parent=1 // pred_region
      _
    $region69: #{tpu_custom_call.1} parent=1 // pred_fallthru
      _
    // Predicated region
    $region70: #{tpu_custom_call.1} parent=1 // pred_check
      _
    $region71: #{tpu_custom_call.1} parent=1 // pred_check_branch
      %171 = sbr.rel (0) target = $region73
    $region72: #{tpu_custom_call.1} parent=1 // pred_region
      %172 = dma.done [#allocation3], 128
    $region73: #{tpu_custom_call.1} parent=1 // pred_fallthru
      _
    // Predicated region
    $region74: #{tpu_custom_call.1} parent=1 // pred_check
      _
    $region75: #{tpu_custom_call.1} parent=1 // pred_check_branch
      %174 = sbr.rel (0) target = $region77
    $region76: #{tpu_custom_call.1} parent=1 // pred_region
      %175 = dma.done [#allocation6], 256
    $region77: #{tpu_custom_call.1} parent=1 // pred_fallthru
      _
    // Predicated region
    $region78: #{tpu_custom_call.1} parent=1 // pred_check
      _
    $region79: #{tpu_custom_call.1} parent=1 // pred_check_branch
      %177 = sbr.rel (0) target = $region81
    $region80: #{tpu_custom_call.1} parent=1 // pred_region
      %178 = dma.done [#allocation6], 3072
    $region81: #{tpu_custom_call.1} parent=1 // pred_fallthru
      _
    // Predicated region
    $region82: #{tpu_custom_call.1} parent=1 // pred_check
      _
    $region83: #{tpu_custom_call.1} parent=1 // pred_check_branch
      %180 = sbr.rel (0) target = $region85
    $region84: #{tpu_custom_call.1} parent=1 // pred_region
      %181 = dma.done [#allocation9], 512
    $region85: #{tpu_custom_call.1} parent=1 // pred_fallthru
      _
    // Predicated region
    $region86: #{tpu_custom_call.1} parent=1 // pred_check
      _
    $region87: #{tpu_custom_call.1} parent=1 // pred_check_branch
      %183 = sbr.rel (0) target = $region89
    $region88: #{tpu_custom_call.1} parent=1 // pred_region
      %184 = dma.done [#allocation9], 512
    $region89: #{tpu_custom_call.1} parent=1 // pred_fallthru
      _
    // Predicated region
    $region90: #{tpu_custom_call.1} parent=1 // pred_check
      _
    $region91: #{tpu_custom_call.1} parent=1 // pred_check_branch
      %186 = sbr.rel (0) target = $region93
    $region92: #{tpu_custom_call.1} parent=1 // pred_region
      %187 = dma.done [#allocation12], 1536
    $region93: #{tpu_custom_call.1} parent=1 // pred_fallthru
      _
    // Predicated region
    $region94: #{tpu_custom_call.1} parent=1 // pred_check
      _
    $region95: #{tpu_custom_call.1} parent=1 // pred_check_branch
      %189 = sbr.rel (0) target = $region97
    $region96: #{tpu_custom_call.1} parent=1 // pred_region
      %190 = dma.done [#allocation12], 512
    $region97: #{tpu_custom_call.1} parent=1 // pred_fallthru
      _
    // Predicated region
    $region98: #{tpu_custom_call.1} parent=1 // pred_check
      _
    $region99: #{tpu_custom_call.1} parent=1 // pred_check_branch
      %192 = sbr.rel (0) target = $region101
    $region100: #{tpu_custom_call.1} parent=1 // pred_region
      %193 = dma.done [#allocation15], 16
    $region101: #{tpu_custom_call.1} parent=1 // pred_fallthru
      _
    // Predicated region
    $region102: #{tpu_custom_call.1} parent=1 // pred_check
      _
    $region103: #{tpu_custom_call.1} parent=1 // pred_check_branch
      %195 = sbr.rel (0) target = $region105
    $region104: #{tpu_custom_call.1} parent=1 // pred_region
      %196 = dma.done [#allocation15], 16
    $region105: #{tpu_custom_call.1} parent=1 // pred_fallthru
      _
    // Predicated region
    $region106: #{tpu_custom_call.1} parent=1 // pred_check
      _
    $region107: #{tpu_custom_call.1} parent=1 // pred_check_branch
      %198 = sbr.rel (0) target = $region109
    $region108: #{tpu_custom_call.1} parent=1 // pred_region
      %199 = dma.done [#allocation18], 512
    $region109: #{tpu_custom_call.1} parent=1 // pred_fallthru
      _
    // Predicated region
    $region110: #{tpu_custom_call.1} parent=1 // pred_check
      _
    $region111: #{tpu_custom_call.1} parent=1 // pred_check_branch
      %201 = sbr.rel (0) target = $region113
    $region112: #{tpu_custom_call.1} parent=1 // pred_region
      %202 = dma.done [#allocation18], 2048
    $region113: #{tpu_custom_call.1} parent=1 // pred_fallthru
      _
    %v203 = vld [vmem:[#allocation2] sm:$0xff]
    %v204 = vld [vmem:[#allocation5] sm:$0xff]
    %v205 = vld [vmem:[#allocation5 + $0x8] sm:$0xff]
    %v206 = vld [vmem:[#allocation7] sm:$0xff]
    %v207 = vld [vmem:[#allocation7 + $0x8] sm:$0xff]
    %v208 = vld [vmem:[#allocation7 + $0x10] sm:$0xff]
    %v209 = vld [vmem:[#allocation7 + $0x18] sm:$0xff]
    %v210 = vld [vmem:[#allocation7 + $0x20] sm:$0xff]
    %v211 = vld [vmem:[#allocation7 + $0x28] sm:$0xff]
    %v212 = vld [vmem:[#allocation7 + $0x30] sm:$0xff]
    %v213 = vld [vmem:[#allocation7 + $0x38] sm:$0xff]
    %v214 = vld [vmem:[#allocation7 + $0x40] sm:$0xff]
    %v215 = vld [vmem:[#allocation7 + $0x48] sm:$0xff]
    %v216 = vld [vmem:[#allocation7 + $0x50] sm:$0xff]
    %v217 = vld [vmem:[#allocation7 + $0x58] sm:$0xff]
    %v218 = vld [vmem:[#allocation7 + $0x60] sm:$0xff]
    %v219 = vld [vmem:[#allocation7 + $0x68] sm:$0xff]
    %v220 = vld [vmem:[#allocation7 + $0x70] sm:$0xff]
    %v221 = vld [vmem:[#allocation7 + $0x78] sm:$0xff]
    %v222 = vld [vmem:[#allocation7 + $0x80] sm:$0xff]
    %v223 = vld [vmem:[#allocation7 + $0x88] sm:$0xff]
    %v224 = vld [vmem:[#allocation7 + $0x90] sm:$0xff]
    %v225 = vld [vmem:[#allocation7 + $0x98] sm:$0xff]
    %v226 = vld [vmem:[#allocation7 + $0xa0] sm:$0xff]
    %v227 = vld [vmem:[#allocation7 + $0xa8] sm:$0xff]
    %v228 = vld [vmem:[#allocation7 + $0xb0] sm:$0xff]
    %v229 = vld [vmem:[#allocation7 + $0xb8] sm:$0xff]
    %vm230 = vcmask 261120
    %v231 = vsel %vm230, %v204, 0.0
    %v232 = vsel %vm230, %v205, 0.0
    %v233 = vadd.f32 %v231, %v232
    %v234 = vrcp.pop 2.0
    %v235 = vmul.f32 %v233, %v234
    %v236 = vld [vmem:[#allocation8] sm:$0xff]
    %v237 = vld [vmem:[#allocation8 + $0x8] sm:$0xff]
    %v238 = vld [vmem:[#allocation8 + $0x10] sm:$0xff]
    %v239 = vld [vmem:[#allocation8 + $0x18] sm:$0xff]
    %v240 = vld [vmem:[%s5] sm:$0x1]
    %v242 = vlaneseq
    %v243 = vshrl.u32 %v242, 7
    %v244 = vsub.s32 0, %v243
    %v245 = vrot.slane %v240, %v244
    %v248 = vsel %vm230, %v235, 0
    %250 = vmatprep.subr.mxu0 0.0
    %251 = vmatpush1.msra.mxu0 %v236
    %252 = vmatprep.subr.mxu0 0.0
    %253 = vmatpush1.msra.mxu0 %v237
    %254 = vmatprep.subr.mxu0 0.0
    %255 = vmatpush1.msra.mxu0 %v238
    %256 = vmatprep.subr.mxu0 0.0
    %257 = vmatpush1.msra.mxu0 %v239
    %258 = vmatprep.subr.mxu0 0.0
    %259 = vmatpush1.msra.mxu0 0.0
    %260 = vmatprep.subr.mxu0 0.0
    %261 = vmatpush1.msra.mxu0 0.0
    %262 = vmatprep.subr.mxu0 0.0
    %263 = vmatpush1.msra.mxu0 0.0
    %264 = vmatprep.subr.mxu0 0.0
    %265 = vmatpush1.msra.mxu0 0.0
    %266 = vmatprep.subr.mxu0 0.0
    %267 = vmatpush1.msra.mxu0 0.0
    %268 = vmatprep.subr.mxu0 0.0
    %269 = vmatpush1.msra.mxu0 0.0
    %270 = vmatprep.subr.mxu0 0.0
    %271 = vmatpush1.msra.mxu0 0.0
    %272 = vmatprep.subr.mxu0 0.0
    %273 = vmatpush1.msra.mxu0 0.0
    %274 = vmatprep.subr.mxu0 0.0
    %275 = vmatpush1.msra.mxu0 0.0
    %276 = vmatprep.subr.mxu0 0.0
    %277 = vmatpush1.msra.mxu0 0.0
    %278 = vmatprep.subr.mxu0 0.0
    %279 = vmatpush1.msra.mxu0 0.0
    %280 = vmatprep.subr.mxu0 0.0
    %281 = vmatpush1.msra.mxu0 0.0
    %282 = vmatprep.subr.mxu0 0.0
    %283 = vmatpush1.msra.mxu0 0.0
    %284 = vmatprep.subr.mxu0 0.0
    %285 = vmatpush1.msra.mxu0 0.0
    %286 = vmatprep.subr.mxu0 0.0
    %287 = vmatpush1.msra.mxu0 0.0
    %288 = vmatprep.subr.mxu0 0.0
    %289 = vmatpush1.msra.mxu0 0.0
    %290 = vmatprep.subr.mxu0 0.0
    %291 = vmatpush1.msra.mxu0 0.0
    %292 = vmatprep.subr.mxu0 0.0
    %293 = vmatpush1.msra.mxu0 0.0
    %294 = vmatprep.subr.mxu0 0.0
    %295 = vmatpush1.msra.mxu0 0.0
    %296 = vmatprep.subr.mxu0 0.0
    %297 = vmatpush1.msra.mxu0 0.0
    %298 = vmatprep.subr.mxu0 0.0
    %299 = vmatpush1.msra.mxu0 0.0
    %300 = vmatprep.subr.mxu0 0.0
    %301 = vmatpush1.msra.mxu0 0.0
    %302 = vmatprep.subr.mxu0 0.0
    %303 = vmatpush1.msra.mxu0 0.0
    %304 = vmatprep.subr.mxu0 0.0
    %305 = vmatpush1.msra.mxu0 0.0
    %306 = vmatprep.subr.mxu0 0.0
    %307 = vmatpush1.msra.mxu0 0.0
    %308 = vmatprep.subr.mxu0 0.0
    %309 = vmatpush1.msra.mxu0 0.0
    %310 = vmatprep.subr.mxu0 0.0
    %311 = vmatpush1.msra.mxu0 0.0
    %312 = vmatprep.subr.mxu0 0.0
    %313 = vmatpush1.msra.mxu0 0.0
    %314 = vmatprep.mubr.f32.mxu0 0.0
    %315 = vmatmul.mubr.f32.gmra.mrb[0].mxu0 %v248
    %v316 = vpop.f32.mrb[0].mxu0
    %v317 = vadd.f32 %v245, %v316
    %v318 = vpop.f32.mrb[0].mxu0
    %319 = vdwg.mxu0
    %v320 = vld [vmem:[#allocation10] sm:$0xff]
    %v321 = vld [vmem:[#allocation10 + $0x8] sm:$0xff]
    %v322 = vld [vmem:[#allocation10 + $0x10] sm:$0xff]
    %v323 = vld [vmem:[#allocation10 + $0x18] sm:$0xff]
    %v325 = vsel %vm230, %v317, 0
    %327 = vmatprep.subr.mxu0 0.0
    %328 = vmatpush1.msra.mxu0 %v320
    %329 = vmatprep.subr.mxu0 0.0
    %330 = vmatpush1.msra.mxu0 %v321
    %331 = vmatprep.subr.mxu0 0.0
    %332 = vmatpush1.msra.mxu0 %v322
    %333 = vmatprep.subr.mxu0 0.0
    %334 = vmatpush1.msra.mxu0 %v323
    %335 = vmatprep.subr.mxu0 0.0
    %336 = vmatpush1.msra.mxu0 0.0
    %337 = vmatprep.subr.mxu0 0.0
    %338 = vmatpush1.msra.mxu0 0.0
    %339 = vmatprep.subr.mxu0 0.0
    %340 = vmatpush1.msra.mxu0 0.0
    %341 = vmatprep.subr.mxu0 0.0
    %342 = vmatpush1.msra.mxu0 0.0
    %343 = vmatprep.subr.mxu0 0.0
    %344 = vmatpush1.msra.mxu0 0.0
    %345 = vmatprep.subr.mxu0 0.0
    %346 = vmatpush1.msra.mxu0 0.0
    %347 = vmatprep.subr.mxu0 0.0
    %348 = vmatpush1.msra.mxu0 0.0
    %349 = vmatprep.subr.mxu0 0.0
    %350 = vmatpush1.msra.mxu0 0.0
    %351 = vmatprep.subr.mxu0 0.0
    %352 = vmatpush1.msra.mxu0 0.0
    %353 = vmatprep.subr.mxu0 0.0
    %354 = vmatpush1.msra.mxu0 0.0
    %355 = vmatprep.subr.mxu0 0.0
    %356 = vmatpush1.msra.mxu0 0.0
    %357 = vmatprep.subr.mxu0 0.0
    %358 = vmatpush1.msra.mxu0 0.0
    %359 = vmatprep.subr.mxu0 0.0
    %360 = vmatpush1.msra.mxu0 0.0
    %361 = vmatprep.subr.mxu0 0.0
    %362 = vmatpush1.msra.mxu0 0.0
    %363 = vmatprep.subr.mxu0 0.0
    %364 = vmatpush1.msra.mxu0 0.0
    %365 = vmatprep.subr.mxu0 0.0
    %366 = vmatpush1.msra.mxu0 0.0
    %367 = vmatprep.subr.mxu0 0.0
    %368 = vmatpush1.msra.mxu0 0.0
    %369 = vmatprep.subr.mxu0 0.0
    %370 = vmatpush1.msra.mxu0 0.0
    %371 = vmatprep.subr.mxu0 0.0
    %372 = vmatpush1.msra.mxu0 0.0
    %373 = vmatprep.subr.mxu0 0.0
    %374 = vmatpush1.msra.mxu0 0.0
    %375 = vmatprep.subr.mxu0 0.0
    %376 = vmatpush1.msra.mxu0 0.0
    %377 = vmatprep.subr.mxu0 0.0
    %378 = vmatpush1.msra.mxu0 0.0
    %379 = vmatprep.subr.mxu0 0.0
    %380 = vmatpush1.msra.mxu0 0.0
    %381 = vmatprep.subr.mxu0 0.0
    %382 = vmatpush1.msra.mxu0 0.0
    %383 = vmatprep.subr.mxu0 0.0
    %384 = vmatpush1.msra.mxu0 0.0
    %385 = vmatprep.subr.mxu0 0.0
    %386 = vmatpush1.msra.mxu0 0.0
    %387 = vmatprep.subr.mxu0 0.0
    %388 = vmatpush1.msra.mxu0 0.0
    %389 = vmatprep.subr.mxu0 0.0
    %390 = vmatpush1.msra.mxu0 0.0
    %391 = vmatprep.mubr.f32.mxu0 0.0
    %392 = vmatmul.mubr.f32.gmra.mrb[0].mxu0 %v325
    %v393 = vpop.f32.mrb[0].mxu0
    %v394 = vadd.f32 0.0, %v393
    %v395 = vpop.f32.mrb[0].mxu0
    %396 = vdwg.mxu0
    %v398 = vcombine.high %v394, %v394
    %v400 = vunpack.c.l.s4 1966171168
    %v401 = vunpack.c.0.s8 %v400
    %v402 = vlaneseq
    %v403 = vshrl.u32 %v402, 7
    %v404 = vsub.s32 %v401, %v403
    %v405 = vrot.slane %v394, %v404
    %v407 = vunpack.c.l.s4 1966171168
    %v408 = vunpack.c.0.s8 %v407
    %v409 = vlaneseq
    %v410 = vshrl.u32 %v409, 7
    %v411 = vsub.s32 %v408, %v410
    %v412 = vrot.slane %v398, %v411
    %v413 = vcombine.high %v405, %v405
    %v414 = vcombine.high %v412, %v412
    %v416 = vunpack.c.l.s4 1966171168
    %v417 = vunpack.c.0.s8 %v416
    %v418 = vlaneseq
    %v419 = vshrl.u32 %v418, 7
    %v420 = vsub.s32 %v417, %v419
    %v421 = vrot.slane %v405, %v420
    %v423 = vunpack.c.l.s4 1966171168
    %v424 = vunpack.c.0.s8 %v423
    %v425 = vlaneseq
    %v426 = vshrl.u32 %v425, 7
    %v427 = vsub.s32 %v424, %v426
    %v428 = vrot.slane %v412, %v427
    %v430 = vunpack.c.l.s4 1966171168
    %v431 = vunpack.c.0.s8 %v430
    %v432 = vlaneseq
    %v433 = vshrl.u32 %v432, 7
    %v434 = vsub.s32 %v431, %v433
    %v435 = vrot.slane %v413, %v434
    %v437 = vunpack.c.l.s4 1966171168
    %v438 = vunpack.c.0.s8 %v437
    %v439 = vlaneseq
    %v440 = vshrl.u32 %v439, 7
    %v441 = vsub.s32 %v438, %v440
    %v442 = vrot.slane %v414, %v441
    %v443 = vcombine.high %v421, %v421
    %v444 = vcombine.high %v428, %v428
    %v445 = vcombine.high %v435, %v435
    %v446 = vcombine.high %v442, %v442
    %v447 = vsel %vm230, %v421, 0
    %v450 = vsel %vm230, %v206, 0
    %v453 = vsel %vm230, %v207, 0
    %v456 = vsel %vm230, %v208, 0
    %458 = vmatprep.subr.mxu0 0.0
    %459 = vmatpush1.xpose.msra.mxu0 %v450
    %460 = vmatprep.subr.mxu0 0.0
    %461 = vmatpush1.xpose.msra.mxu0 %v453
    %462 = vmatprep.subr.mxu0 0.0
    %463 = vmatpush1.xpose.msra.mxu0 %v456
    %464 = vmatprep.subr.mxu0 0.0
    %465 = vmatpush1.xpose.msra.mxu0 0.0
    %466 = vmatprep.subr.mxu0 0.0
    %467 = vmatpush1.xpose.msra.mxu0 0.0
    %468 = vmatprep.subr.mxu0 0.0
    %469 = vmatpush1.xpose.msra.mxu0 0.0
    %470 = vmatprep.subr.mxu0 0.0
    %471 = vmatpush1.xpose.msra.mxu0 0.0
    %472 = vmatprep.subr.mxu0 0.0
    %473 = vmatpush1.xpose.msra.mxu0 0.0
    %474 = vmatprep.subr.mxu0 0.0
    %475 = vmatpush1.xpose.msra.mxu0 0.0
    %476 = vmatprep.subr.mxu0 0.0
    %477 = vmatpush1.xpose.msra.mxu0 0.0
    %478 = vmatprep.subr.mxu0 0.0
    %479 = vmatpush1.xpose.msra.mxu0 0.0
    %480 = vmatprep.subr.mxu0 0.0
    %481 = vmatpush1.xpose.msra.mxu0 0.0
    %482 = vmatprep.subr.mxu0 0.0
    %483 = vmatpush1.xpose.msra.mxu0 0.0
    %484 = vmatprep.subr.mxu0 0.0
    %485 = vmatpush1.xpose.msra.mxu0 0.0
    %486 = vmatprep.subr.mxu0 0.0
    %487 = vmatpush1.xpose.msra.mxu0 0.0
    %488 = vmatprep.subr.mxu0 0.0
    %489 = vmatpush1.xpose.msra.mxu0 0.0
    %490 = vmatprep.subr.mxu0 0.0
    %491 = vmatpush1.xpose.msra.mxu0 0.0
    %492 = vmatprep.subr.mxu0 0.0
    %493 = vmatpush1.xpose.msra.mxu0 0.0
    %494 = vmatprep.subr.mxu0 0.0
    %495 = vmatpush1.xpose.msra.mxu0 0.0
    %496 = vmatprep.subr.mxu0 0.0
    %497 = vmatpush1.xpose.msra.mxu0 0.0
    %498 = vmatprep.subr.mxu0 0.0
    %499 = vmatpush1.xpose.msra.mxu0 0.0
    %500 = vmatprep.subr.mxu0 0.0
    %501 = vmatpush1.xpose.msra.mxu0 0.0
    %502 = vmatprep.subr.mxu0 0.0
    %503 = vmatpush1.xpose.msra.mxu0 0.0
    %504 = vmatprep.subr.mxu0 0.0
    %505 = vmatpush1.xpose.msra.mxu0 0.0
    %506 = vmatprep.subr.mxu0 0.0
    %507 = vmatpush1.xpose.msra.mxu0 0.0
    %508 = vmatprep.subr.mxu0 0.0
    %509 = vmatpush1.xpose.msra.mxu0 0.0
    %510 = vmatprep.subr.mxu0 0.0
    %511 = vmatpush1.xpose.msra.mxu0 0.0
    %512 = vmatprep.subr.mxu0 0.0
    %513 = vmatpush1.xpose.msra.mxu0 0.0
    %514 = vmatprep.subr.mxu0 0.0
    %515 = vmatpush1.xpose.msra.mxu0 0.0
    %516 = vmatprep.subr.mxu0 0.0
    %517 = vmatpush1.xpose.msra.mxu0 0.0
    %518 = vmatprep.subr.mxu0 0.0
    %519 = vmatpush1.xpose.msra.mxu0 0.0
    %520 = vmatprep.subr.mxu0 0.0
    %521 = vmatpush1.xpose.msra.mxu0 0.0
    %522 = vmatprep.mubr.f32.mxu0 0.0
    %523 = vmatmul.mubr.f32.gmra.mrb[0].mxu0 %v447
    %v524 = vpop.f32.mrb[0].mxu0
    %v525 = vadd.f32 0.0, %v524
    %v526 = vpop.f32.mrb[0].mxu0
    %527 = vdwg.mxu0
    %v528 = vsel %vm230, %v435, 0
    %v531 = vsel %vm230, %v209, 0
    %v534 = vsel %vm230, %v210, 0
    %v537 = vsel %vm230, %v211, 0
    %539 = vmatprep.subr.mxu0 0.0
    %540 = vmatpush1.xpose.msra.mxu0 %v531
    %541 = vmatprep.subr.mxu0 0.0
    %542 = vmatpush1.xpose.msra.mxu0 %v534
    %543 = vmatprep.subr.mxu0 0.0
    %544 = vmatpush1.xpose.msra.mxu0 %v537
    %545 = vmatprep.subr.mxu0 0.0
    %546 = vmatpush1.xpose.msra.mxu0 0.0
    %547 = vmatprep.subr.mxu0 0.0
    %548 = vmatpush1.xpose.msra.mxu0 0.0
    %549 = vmatprep.subr.mxu0 0.0
    %550 = vmatpush1.xpose.msra.mxu0 0.0
    %551 = vmatprep.subr.mxu0 0.0
    %552 = vmatpush1.xpose.msra.mxu0 0.0
    %553 = vmatprep.subr.mxu0 0.0
    %554 = vmatpush1.xpose.msra.mxu0 0.0
    %555 = vmatprep.subr.mxu0 0.0
    %556 = vmatpush1.xpose.msra.mxu0 0.0
    %557 = vmatprep.subr.mxu0 0.0
    %558 = vmatpush1.xpose.msra.mxu0 0.0
    %559 = vmatprep.subr.mxu0 0.0
    %560 = vmatpush1.xpose.msra.mxu0 0.0
    %561 = vmatprep.subr.mxu0 0.0
    %562 = vmatpush1.xpose.msra.mxu0 0.0
    %563 = vmatprep.subr.mxu0 0.0
    %564 = vmatpush1.xpose.msra.mxu0 0.0
    %565 = vmatprep.subr.mxu0 0.0
    %566 = vmatpush1.xpose.msra.mxu0 0.0
    %567 = vmatprep.subr.mxu0 0.0
    %568 = vmatpush1.xpose.msra.mxu0 0.0
    %569 = vmatprep.subr.mxu0 0.0
    %570 = vmatpush1.xpose.msra.mxu0 0.0
    %571 = vmatprep.subr.mxu0 0.0
    %572 = vmatpush1.xpose.msra.mxu0 0.0
    %573 = vmatprep.subr.mxu0 0.0
    %574 = vmatpush1.xpose.msra.mxu0 0.0
    %575 = vmatprep.subr.mxu0 0.0
    %576 = vmatpush1.xpose.msra.mxu0 0.0
    %577 = vmatprep.subr.mxu0 0.0
    %578 = vmatpush1.xpose.msra.mxu0 0.0
    %579 = vmatprep.subr.mxu0 0.0
    %580 = vmatpush1.xpose.msra.mxu0 0.0
    %581 = vmatprep.subr.mxu0 0.0
    %582 = vmatpush1.xpose.msra.mxu0 0.0
    %583 = vmatprep.subr.mxu0 0.0
    %584 = vmatpush1.xpose.msra.mxu0 0.0
    %585 = vmatprep.subr.mxu0 0.0
    %586 = vmatpush1.xpose.msra.mxu0 0.0
    %587 = vmatprep.subr.mxu0 0.0
    %588 = vmatpush1.xpose.msra.mxu0 0.0
    %589 = vmatprep.subr.mxu0 0.0
    %590 = vmatpush1.xpose.msra.mxu0 0.0
    %591 = vmatprep.subr.mxu0 0.0
    %592 = vmatpush1.xpose.msra.mxu0 0.0
    %593 = vmatprep.subr.mxu0 0.0
    %594 = vmatpush1.xpose.msra.mxu0 0.0
    %595 = vmatprep.subr.mxu0 0.0
    %596 = vmatpush1.xpose.msra.mxu0 0.0
    %597 = vmatprep.subr.mxu0 0.0
    %598 = vmatpush1.xpose.msra.mxu0 0.0
    %599 = vmatprep.subr.mxu0 0.0
    %600 = vmatpush1.xpose.msra.mxu0 0.0
    %601 = vmatprep.subr.mxu0 0.0
    %602 = vmatpush1.xpose.msra.mxu0 0.0
    %603 = vmatprep.mubr.f32.mxu0 0.0
    %604 = vmatmul.mubr.f32.gmra.mrb[0].mxu0 %v528
    %v605 = vpop.f32.mrb[0].mxu0
    %v606 = vadd.f32 0.0, %v605
    %v607 = vpop.f32.mrb[0].mxu0
    %608 = vdwg.mxu0
    %v609 = vsel %vm230, %v443, 0
    %v612 = vsel %vm230, %v212, 0
    %v615 = vsel %vm230, %v213, 0
    %v618 = vsel %vm230, %v214, 0
    %620 = vmatprep.subr.mxu0 0.0
    %621 = vmatpush1.xpose.msra.mxu0 %v612
    %622 = vmatprep.subr.mxu0 0.0
    %623 = vmatpush1.xpose.msra.mxu0 %v615
    %624 = vmatprep.subr.mxu0 0.0
    %625 = vmatpush1.xpose.msra.mxu0 %v618
    %626 = vmatprep.subr.mxu0 0.0
    %627 = vmatpush1.xpose.msra.mxu0 0.0
    %628 = vmatprep.subr.mxu0 0.0
    %629 = vmatpush1.xpose.msra.mxu0 0.0
    %630 = vmatprep.subr.mxu0 0.0
    %631 = vmatpush1.xpose.msra.mxu0 0.0
    %632 = vmatprep.subr.mxu0 0.0
    %633 = vmatpush1.xpose.msra.mxu0 0.0
    %634 = vmatprep.subr.mxu0 0.0
    %635 = vmatpush1.xpose.msra.mxu0 0.0
    %636 = vmatprep.subr.mxu0 0.0
    %637 = vmatpush1.xpose.msra.mxu0 0.0
    %638 = vmatprep.subr.mxu0 0.0
    %639 = vmatpush1.xpose.msra.mxu0 0.0
    %640 = vmatprep.subr.mxu0 0.0
    %641 = vmatpush1.xpose.msra.mxu0 0.0
    %642 = vmatprep.subr.mxu0 0.0
    %643 = vmatpush1.xpose.msra.mxu0 0.0
    %644 = vmatprep.subr.mxu0 0.0
    %645 = vmatpush1.xpose.msra.mxu0 0.0
    %646 = vmatprep.subr.mxu0 0.0
    %647 = vmatpush1.xpose.msra.mxu0 0.0
    %648 = vmatprep.subr.mxu0 0.0
    %649 = vmatpush1.xpose.msra.mxu0 0.0
    %650 = vmatprep.subr.mxu0 0.0
    %651 = vmatpush1.xpose.msra.mxu0 0.0
    %652 = vmatprep.subr.mxu0 0.0
    %653 = vmatpush1.xpose.msra.mxu0 0.0
    %654 = vmatprep.subr.mxu0 0.0
    %655 = vmatpush1.xpose.msra.mxu0 0.0
    %656 = vmatprep.subr.mxu0 0.0
    %657 = vmatpush1.xpose.msra.mxu0 0.0
    %658 = vmatprep.subr.mxu0 0.0
    %659 = vmatpush1.xpose.msra.mxu0 0.0
    %660 = vmatprep.subr.mxu0 0.0
    %661 = vmatpush1.xpose.msra.mxu0 0.0
    %662 = vmatprep.subr.mxu0 0.0
    %663 = vmatpush1.xpose.msra.mxu0 0.0
    %664 = vmatprep.subr.mxu0 0.0
    %665 = vmatpush1.xpose.msra.mxu0 0.0
    %666 = vmatprep.subr.mxu0 0.0
    %667 = vmatpush1.xpose.msra.mxu0 0.0
    %668 = vmatprep.subr.mxu0 0.0
    %669 = vmatpush1.xpose.msra.mxu0 0.0
    %670 = vmatprep.subr.mxu0 0.0
    %671 = vmatpush1.xpose.msra.mxu0 0.0
    %672 = vmatprep.subr.mxu0 0.0
    %673 = vmatpush1.xpose.msra.mxu0 0.0
    %674 = vmatprep.subr.mxu0 0.0
    %675 = vmatpush1.xpose.msra.mxu0 0.0
    %676 = vmatprep.subr.mxu0 0.0
    %677 = vmatpush1.xpose.msra.mxu0 0.0
    %678 = vmatprep.subr.mxu0 0.0
    %679 = vmatpush1.xpose.msra.mxu0 0.0
    %680 = vmatprep.subr.mxu0 0.0
    %681 = vmatpush1.xpose.msra.mxu0 0.0
    %682 = vmatprep.subr.mxu0 0.0
    %683 = vmatpush1.xpose.msra.mxu0 0.0
    %684 = vmatprep.mubr.f32.mxu0 0.0
    %685 = vmatmul.mubr.f32.gmra.mrb[0].mxu0 %v609
    %v686 = vpop.f32.mrb[0].mxu0
    %v687 = vadd.f32 0.0, %v686
    %v688 = vpop.f32.mrb[0].mxu0
    %689 = vdwg.mxu0
    %v690 = vsel %vm230, %v445, 0
    %v693 = vsel %vm230, %v215, 0
    %v696 = vsel %vm230, %v216, 0
    %v699 = vsel %vm230, %v217, 0
    %701 = vmatprep.subr.mxu0 0.0
    %702 = vmatpush1.xpose.msra.mxu0 %v693
    %703 = vmatprep.subr.mxu0 0.0
    %704 = vmatpush1.xpose.msra.mxu0 %v696
    %705 = vmatprep.subr.mxu0 0.0
    %706 = vmatpush1.xpose.msra.mxu0 %v699
    %707 = vmatprep.subr.mxu0 0.0
    %708 = vmatpush1.xpose.msra.mxu0 0.0
    %709 = vmatprep.subr.mxu0 0.0
    %710 = vmatpush1.xpose.msra.mxu0 0.0
    %711 = vmatprep.subr.mxu0 0.0
    %712 = vmatpush1.xpose.msra.mxu0 0.0
    %713 = vmatprep.subr.mxu0 0.0
    %714 = vmatpush1.xpose.msra.mxu0 0.0
    %715 = vmatprep.subr.mxu0 0.0
    %716 = vmatpush1.xpose.msra.mxu0 0.0
    %717 = vmatprep.subr.mxu0 0.0
    %718 = vmatpush1.xpose.msra.mxu0 0.0
    %719 = vmatprep.subr.mxu0 0.0
    %720 = vmatpush1.xpose.msra.mxu0 0.0
    %721 = vmatprep.subr.mxu0 0.0
    %722 = vmatpush1.xpose.msra.mxu0 0.0
    %723 = vmatprep.subr.mxu0 0.0
    %724 = vmatpush1.xpose.msra.mxu0 0.0
    %725 = vmatprep.subr.mxu0 0.0
    %726 = vmatpush1.xpose.msra.mxu0 0.0
    %727 = vmatprep.subr.mxu0 0.0
    %728 = vmatpush1.xpose.msra.mxu0 0.0
    %729 = vmatprep.subr.mxu0 0.0
    %730 = vmatpush1.xpose.msra.mxu0 0.0
    %731 = vmatprep.subr.mxu0 0.0
    %732 = vmatpush1.xpose.msra.mxu0 0.0
    %733 = vmatprep.subr.mxu0 0.0
    %734 = vmatpush1.xpose.msra.mxu0 0.0
    %735 = vmatprep.subr.mxu0 0.0
    %736 = vmatpush1.xpose.msra.mxu0 0.0
    %737 = vmatprep.subr.mxu0 0.0
    %738 = vmatpush1.xpose.msra.mxu0 0.0
    %739 = vmatprep.subr.mxu0 0.0
    %740 = vmatpush1.xpose.msra.mxu0 0.0
    %741 = vmatprep.subr.mxu0 0.0
    %742 = vmatpush1.xpose.msra.mxu0 0.0
    %743 = vmatprep.subr.mxu0 0.0
    %744 = vmatpush1.xpose.msra.mxu0 0.0
    %745 = vmatprep.subr.mxu0 0.0
    %746 = vmatpush1.xpose.msra.mxu0 0.0
    %747 = vmatprep.subr.mxu0 0.0
    %748 = vmatpush1.xpose.msra.mxu0 0.0
    %749 = vmatprep.subr.mxu0 0.0
    %750 = vmatpush1.xpose.msra.mxu0 0.0
    %751 = vmatprep.subr.mxu0 0.0
    %752 = vmatpush1.xpose.msra.mxu0 0.0
    %753 = vmatprep.subr.mxu0 0.0
    %754 = vmatpush1.xpose.msra.mxu0 0.0
    %755 = vmatprep.subr.mxu0 0.0
    %756 = vmatpush1.xpose.msra.mxu0 0.0
    %757 = vmatprep.subr.mxu0 0.0
    %758 = vmatpush1.xpose.msra.mxu0 0.0
    %759 = vmatprep.subr.mxu0 0.0
    %760 = vmatpush1.xpose.msra.mxu0 0.0
    %761 = vmatprep.subr.mxu0 0.0
    %762 = vmatpush1.xpose.msra.mxu0 0.0
    %763 = vmatprep.subr.mxu0 0.0
    %764 = vmatpush1.xpose.msra.mxu0 0.0
    %765 = vmatprep.mubr.f32.mxu0 0.0
    %766 = vmatmul.mubr.f32.gmra.mrb[0].mxu0 %v690
    %v767 = vpop.f32.mrb[0].mxu0
    %v768 = vadd.f32 0.0, %v767
    %v769 = vpop.f32.mrb[0].mxu0
    %770 = vdwg.mxu0
    %v771 = vsel %vm230, %v428, 0
    %v774 = vsel %vm230, %v218, 0
    %v777 = vsel %vm230, %v219, 0
    %v780 = vsel %vm230, %v220, 0
    %782 = vmatprep.subr.mxu0 0.0
    %783 = vmatpush1.xpose.msra.mxu0 %v774
    %784 = vmatprep.subr.mxu0 0.0
    %785 = vmatpush1.xpose.msra.mxu0 %v777
    %786 = vmatprep.subr.mxu0 0.0
    %787 = vmatpush1.xpose.msra.mxu0 %v780
    %788 = vmatprep.subr.mxu0 0.0
    %789 = vmatpush1.xpose.msra.mxu0 0.0
    %790 = vmatprep.subr.mxu0 0.0
    %791 = vmatpush1.xpose.msra.mxu0 0.0
    %792 = vmatprep.subr.mxu0 0.0
    %793 = vmatpush1.xpose.msra.mxu0 0.0
    %794 = vmatprep.subr.mxu0 0.0
    %795 = vmatpush1.xpose.msra.mxu0 0.0
    %796 = vmatprep.subr.mxu0 0.0
    %797 = vmatpush1.xpose.msra.mxu0 0.0
    %798 = vmatprep.subr.mxu0 0.0
    %799 = vmatpush1.xpose.msra.mxu0 0.0
    %800 = vmatprep.subr.mxu0 0.0
    %801 = vmatpush1.xpose.msra.mxu0 0.0
    %802 = vmatprep.subr.mxu0 0.0
    %803 = vmatpush1.xpose.msra.mxu0 0.0
    %804 = vmatprep.subr.mxu0 0.0
    %805 = vmatpush1.xpose.msra.mxu0 0.0
    %806 = vmatprep.subr.mxu0 0.0
    %807 = vmatpush1.xpose.msra.mxu0 0.0
    %808 = vmatprep.subr.mxu0 0.0
    %809 = vmatpush1.xpose.msra.mxu0 0.0
    %810 = vmatprep.subr.mxu0 0.0
    %811 = vmatpush1.xpose.msra.mxu0 0.0
    %812 = vmatprep.subr.mxu0 0.0
    %813 = vmatpush1.xpose.msra.mxu0 0.0
    %814 = vmatprep.subr.mxu0 0.0
    %815 = vmatpush1.xpose.msra.mxu0 0.0
    %816 = vmatprep.subr.mxu0 0.0
    %817 = vmatpush1.xpose.msra.mxu0 0.0
    %818 = vmatprep.subr.mxu0 0.0
    %819 = vmatpush1.xpose.msra.mxu0 0.0
    %820 = vmatprep.subr.mxu0 0.0
    %821 = vmatpush1.xpose.msra.mxu0 0.0
    %822 = vmatprep.subr.mxu0 0.0
    %823 = vmatpush1.xpose.msra.mxu0 0.0
    %824 = vmatprep.subr.mxu0 0.0
    %825 = vmatpush1.xpose.msra.mxu0 0.0
    %826 = vmatprep.subr.mxu0 0.0
    %827 = vmatpush1.xpose.msra.mxu0 0.0
    %828 = vmatprep.subr.mxu0 0.0
    %829 = vmatpush1.xpose.msra.mxu0 0.0
    %830 = vmatprep.subr.mxu0 0.0
    %831 = vmatpush1.xpose.msra.mxu0 0.0
    %832 = vmatprep.subr.mxu0 0.0
    %833 = vmatpush1.xpose.msra.mxu0 0.0
    %834 = vmatprep.subr.mxu0 0.0
    %835 = vmatpush1.xpose.msra.mxu0 0.0
    %836 = vmatprep.subr.mxu0 0.0
    %837 = vmatpush1.xpose.msra.mxu0 0.0
    %838 = vmatprep.subr.mxu0 0.0
    %839 = vmatpush1.xpose.msra.mxu0 0.0
    %840 = vmatprep.subr.mxu0 0.0
    %841 = vmatpush1.xpose.msra.mxu0 0.0
    %842 = vmatprep.subr.mxu0 0.0
    %843 = vmatpush1.xpose.msra.mxu0 0.0
    %844 = vmatprep.subr.mxu0 0.0
    %845 = vmatpush1.xpose.msra.mxu0 0.0
    %846 = vmatprep.mubr.f32.mxu0 0.0
    %847 = vmatmul.mubr.f32.gmra.mrb[0].mxu0 %v771
    %v848 = vpop.f32.mrb[0].mxu0
    %v849 = vadd.f32 0.0, %v848
    %v850 = vpop.f32.mrb[0].mxu0
    %851 = vdwg.mxu0
    %v852 = vsel %vm230, %v442, 0
    %v855 = vsel %vm230, %v221, 0
    %v858 = vsel %vm230, %v222, 0
    %v861 = vsel %vm230, %v223, 0
    %863 = vmatprep.subr.mxu0 0.0
    %864 = vmatpush1.xpose.msra.mxu0 %v855
    %865 = vmatprep.subr.mxu0 0.0
    %866 = vmatpush1.xpose.msra.mxu0 %v858
    %867 = vmatprep.subr.mxu0 0.0
    %868 = vmatpush1.xpose.msra.mxu0 %v861
    %869 = vmatprep.subr.mxu0 0.0
    %870 = vmatpush1.xpose.msra.mxu0 0.0
    %871 = vmatprep.subr.mxu0 0.0
    %872 = vmatpush1.xpose.msra.mxu0 0.0
    %873 = vmatprep.subr.mxu0 0.0
    %874 = vmatpush1.xpose.msra.mxu0 0.0
    %875 = vmatprep.subr.mxu0 0.0
    %876 = vmatpush1.xpose.msra.mxu0 0.0
    %877 = vmatprep.subr.mxu0 0.0
    %878 = vmatpush1.xpose.msra.mxu0 0.0
    %879 = vmatprep.subr.mxu0 0.0
    %880 = vmatpush1.xpose.msra.mxu0 0.0
    %881 = vmatprep.subr.mxu0 0.0
    %882 = vmatpush1.xpose.msra.mxu0 0.0
    %883 = vmatprep.subr.mxu0 0.0
    %884 = vmatpush1.xpose.msra.mxu0 0.0
    %885 = vmatprep.subr.mxu0 0.0
    %886 = vmatpush1.xpose.msra.mxu0 0.0
    %887 = vmatprep.subr.mxu0 0.0
    %888 = vmatpush1.xpose.msra.mxu0 0.0
    %889 = vmatprep.subr.mxu0 0.0
    %890 = vmatpush1.xpose.msra.mxu0 0.0
    %891 = vmatprep.subr.mxu0 0.0
    %892 = vmatpush1.xpose.msra.mxu0 0.0
    %893 = vmatprep.subr.mxu0 0.0
    %894 = vmatpush1.xpose.msra.mxu0 0.0
    %895 = vmatprep.subr.mxu0 0.0
    %896 = vmatpush1.xpose.msra.mxu0 0.0
    %897 = vmatprep.subr.mxu0 0.0
    %898 = vmatpush1.xpose.msra.mxu0 0.0
    %899 = vmatprep.subr.mxu0 0.0
    %900 = vmatpush1.xpose.msra.mxu0 0.0
    %901 = vmatprep.subr.mxu0 0.0
    %902 = vmatpush1.xpose.msra.mxu0 0.0
    %903 = vmatprep.subr.mxu0 0.0
    %904 = vmatpush1.xpose.msra.mxu0 0.0
    %905 = vmatprep.subr.mxu0 0.0
    %906 = vmatpush1.xpose.msra.mxu0 0.0
    %907 = vmatprep.subr.mxu0 0.0
    %908 = vmatpush1.xpose.msra.mxu0 0.0
    %909 = vmatprep.subr.mxu0 0.0
    %910 = vmatpush1.xpose.msra.mxu0 0.0
    %911 = vmatprep.subr.mxu0 0.0
    %912 = vmatpush1.xpose.msra.mxu0 0.0
    %913 = vmatprep.subr.mxu0 0.0
    %914 = vmatpush1.xpose.msra.mxu0 0.0
    %915 = vmatprep.subr.mxu0 0.0
    %916 = vmatpush1.xpose.msra.mxu0 0.0
    %917 = vmatprep.subr.mxu0 0.0
    %918 = vmatpush1.xpose.msra.mxu0 0.0
    %919 = vmatprep.subr.mxu0 0.0
    %920 = vmatpush1.xpose.msra.mxu0 0.0
    %921 = vmatprep.subr.mxu0 0.0
    %922 = vmatpush1.xpose.msra.mxu0 0.0
    %923 = vmatprep.subr.mxu0 0.0
    %924 = vmatpush1.xpose.msra.mxu0 0.0
    %925 = vmatprep.subr.mxu0 0.0
    %926 = vmatpush1.xpose.msra.mxu0 0.0
    %927 = vmatprep.mubr.f32.mxu0 0.0
    %928 = vmatmul.mubr.f32.gmra.mrb[0].mxu0 %v852
    %v929 = vpop.f32.mrb[0].mxu0
    %v930 = vadd.f32 0.0, %v929
    %v931 = vpop.f32.mrb[0].mxu0
    %932 = vdwg.mxu0
    %v933 = vsel %vm230, %v444, 0
    %v936 = vsel %vm230, %v224, 0
    %v939 = vsel %vm230, %v225, 0
    %v942 = vsel %vm230, %v226, 0
    %944 = vmatprep.subr.mxu0 0.0
    %945 = vmatpush1.xpose.msra.mxu0 %v936
    %946 = vmatprep.subr.mxu0 0.0
    %947 = vmatpush1.xpose.msra.mxu0 %v939
    %948 = vmatprep.subr.mxu0 0.0
    %949 = vmatpush1.xpose.msra.mxu0 %v942
    %950 = vmatprep.subr.mxu0 0.0
    %951 = vmatpush1.xpose.msra.mxu0 0.0
    %952 = vmatprep.subr.mxu0 0.0
    %953 = vmatpush1.xpose.msra.mxu0 0.0
    %954 = vmatprep.subr.mxu0 0.0
    %955 = vmatpush1.xpose.msra.mxu0 0.0
    %956 = vmatprep.subr.mxu0 0.0
    %957 = vmatpush1.xpose.msra.mxu0 0.0
    %958 = vmatprep.subr.mxu0 0.0
    %959 = vmatpush1.xpose.msra.mxu0 0.0
    %960 = vmatprep.subr.mxu0 0.0
    %961 = vmatpush1.xpose.msra.mxu0 0.0
    %962 = vmatprep.subr.mxu0 0.0
    %963 = vmatpush1.xpose.msra.mxu0 0.0
    %964 = vmatprep.subr.mxu0 0.0
    %965 = vmatpush1.xpose.msra.mxu0 0.0
    %966 = vmatprep.subr.mxu0 0.0
    %967 = vmatpush1.xpose.msra.mxu0 0.0
    %968 = vmatprep.subr.mxu0 0.0
    %969 = vmatpush1.xpose.msra.mxu0 0.0
    %970 = vmatprep.subr.mxu0 0.0
    %971 = vmatpush1.xpose.msra.mxu0 0.0
    %972 = vmatprep.subr.mxu0 0.0
    %973 = vmatpush1.xpose.msra.mxu0 0.0
    %974 = vmatprep.subr.mxu0 0.0
    %975 = vmatpush1.xpose.msra.mxu0 0.0
    %976 = vmatprep.subr.mxu0 0.0
    %977 = vmatpush1.xpose.msra.mxu0 0.0
    %978 = vmatprep.subr.mxu0 0.0
    %979 = vmatpush1.xpose.msra.mxu0 0.0
    %980 = vmatprep.subr.mxu0 0.0
    %981 = vmatpush1.xpose.msra.mxu0 0.0
    %982 = vmatprep.subr.mxu0 0.0
    %983 = vmatpush1.xpose.msra.mxu0 0.0
    %984 = vmatprep.subr.mxu0 0.0
    %985 = vmatpush1.xpose.msra.mxu0 0.0
    %986 = vmatprep.subr.mxu0 0.0
    %987 = vmatpush1.xpose.msra.mxu0 0.0
    %988 = vmatprep.subr.mxu0 0.0
    %989 = vmatpush1.xpose.msra.mxu0 0.0
    %990 = vmatprep.subr.mxu0 0.0
    %991 = vmatpush1.xpose.msra.mxu0 0.0
    %992 = vmatprep.subr.mxu0 0.0
    %993 = vmatpush1.xpose.msra.mxu0 0.0
    %994 = vmatprep.subr.mxu0 0.0
    %995 = vmatpush1.xpose.msra.mxu0 0.0
    %996 = vmatprep.subr.mxu0 0.0
    %997 = vmatpush1.xpose.msra.mxu0 0.0
    %998 = vmatprep.subr.mxu0 0.0
    %999 = vmatpush1.xpose.msra.mxu0 0.0
    %1000 = vmatprep.subr.mxu0 0.0
    %1001 = vmatpush1.xpose.msra.mxu0 0.0
    %1002 = vmatprep.subr.mxu0 0.0
    %1003 = vmatpush1.xpose.msra.mxu0 0.0
    %1004 = vmatprep.subr.mxu0 0.0
    %1005 = vmatpush1.xpose.msra.mxu0 0.0
    %1006 = vmatprep.subr.mxu0 0.0
    %1007 = vmatpush1.xpose.msra.mxu0 0.0
    %1008 = vmatprep.mubr.f32.mxu0 0.0
    %1009 = vmatmul.mubr.f32.gmra.mrb[0].mxu0 %v933
    %v1010 = vpop.f32.mrb[0].mxu0
    %v1011 = vadd.f32 0.0, %v1010
    %v1012 = vpop.f32.mrb[0].mxu0
    %1013 = vdwg.mxu0
    %v1014 = vsel %vm230, %v446, 0
    %v1017 = vsel %vm230, %v227, 0
    %v1020 = vsel %vm230, %v228, 0
    %v1023 = vsel %vm230, %v229, 0
    %1025 = vmatprep.subr.mxu0 0.0
    %1026 = vmatpush1.xpose.msra.mxu0 %v1017
    %1027 = vmatprep.subr.mxu0 0.0
    %1028 = vmatpush1.xpose.msra.mxu0 %v1020
    %1029 = vmatprep.subr.mxu0 0.0
    %1030 = vmatpush1.xpose.msra.mxu0 %v1023
    %1031 = vmatprep.subr.mxu0 0.0
    %1032 = vmatpush1.xpose.msra.mxu0 0.0
    %1033 = vmatprep.subr.mxu0 0.0
    %1034 = vmatpush1.xpose.msra.mxu0 0.0
    %1035 = vmatprep.subr.mxu0 0.0
    %1036 = vmatpush1.xpose.msra.mxu0 0.0
    %1037 = vmatprep.subr.mxu0 0.0
    %1038 = vmatpush1.xpose.msra.mxu0 0.0
    %1039 = vmatprep.subr.mxu0 0.0
    %1040 = vmatpush1.xpose.msra.mxu0 0.0
    %1041 = vmatprep.subr.mxu0 0.0
    %1042 = vmatpush1.xpose.msra.mxu0 0.0
    %1043 = vmatprep.subr.mxu0 0.0
    %1044 = vmatpush1.xpose.msra.mxu0 0.0
    %1045 = vmatprep.subr.mxu0 0.0
    %1046 = vmatpush1.xpose.msra.mxu0 0.0
    %1047 = vmatprep.subr.mxu0 0.0
    %1048 = vmatpush1.xpose.msra.mxu0 0.0
    %1049 = vmatprep.subr.mxu0 0.0
    %1050 = vmatpush1.xpose.msra.mxu0 0.0
    %1051 = vmatprep.subr.mxu0 0.0
    %1052 = vmatpush1.xpose.msra.mxu0 0.0
    %1053 = vmatprep.subr.mxu0 0.0
    %1054 = vmatpush1.xpose.msra.mxu0 0.0
    %1055 = vmatprep.subr.mxu0 0.0
    %1056 = vmatpush1.xpose.msra.mxu0 0.0
    %1057 = vmatprep.subr.mxu0 0.0
    %1058 = vmatpush1.xpose.msra.mxu0 0.0
    %1059 = vmatprep.subr.mxu0 0.0
    %1060 = vmatpush1.xpose.msra.mxu0 0.0
    %1061 = vmatprep.subr.mxu0 0.0
    %1062 = vmatpush1.xpose.msra.mxu0 0.0
    %1063 = vmatprep.subr.mxu0 0.0
    %1064 = vmatpush1.xpose.msra.mxu0 0.0
    %1065 = vmatprep.subr.mxu0 0.0
    %1066 = vmatpush1.xpose.msra.mxu0 0.0
    %1067 = vmatprep.subr.mxu0 0.0
    %1068 = vmatpush1.xpose.msra.mxu0 0.0
    %1069 = vmatprep.subr.mxu0 0.0
    %1070 = vmatpush1.xpose.msra.mxu0 0.0
    %1071 = vmatprep.subr.mxu0 0.0
    %1072 = vmatpush1.xpose.msra.mxu0 0.0
    %1073 = vmatprep.subr.mxu0 0.0
    %1074 = vmatpush1.xpose.msra.mxu0 0.0
    %1075 = vmatprep.subr.mxu0 0.0
    %1076 = vmatpush1.xpose.msra.mxu0 0.0
    %1077 = vmatprep.subr.mxu0 0.0
    %1078 = vmatpush1.xpose.msra.mxu0 0.0
    %1079 = vmatprep.subr.mxu0 0.0
    %1080 = vmatpush1.xpose.msra.mxu0 0.0
    %1081 = vmatprep.subr.mxu0 0.0
    %1082 = vmatpush1.xpose.msra.mxu0 0.0
    %1083 = vmatprep.subr.mxu0 0.0
    %1084 = vmatpush1.xpose.msra.mxu0 0.0
    %1085 = vmatprep.subr.mxu0 0.0
    %1086 = vmatpush1.xpose.msra.mxu0 0.0
    %1087 = vmatprep.subr.mxu0 0.0
    %1088 = vmatpush1.xpose.msra.mxu0 0.0
    %1089 = vmatprep.mubr.f32.mxu0 0.0
    %1090 = vmatmul.mubr.f32.gmra.mrb[0].mxu0 %v1014
    %v1091 = vpop.f32.mrb[0].mxu0
    %v1092 = vadd.f32 0.0, %v1091
    %v1093 = vpop.f32.mrb[0].mxu0
    %1094 = vdwg.mxu0
    %v1095 = vmul.f32 %v525, 0.17677669
    %v1096 = vmul.f32 %v606, 0.17677669
    %v1097 = vmul.f32 %v687, 0.17677669
    %v1098 = vmul.f32 %v768, 0.17677669
    %v1099 = vmul.f32 %v849, 0.17677669
    %v1100 = vmul.f32 %v930, 0.17677669
    %v1101 = vmul.f32 %v1011, 0.17677669
    %v1102 = vmul.f32 %v1092, 0.17677669
    %v1103 = vld [vmem:[%s3] sm:$0x1]
    %v1104 = vld [vmem:[%s3 + $0x1] sm:$0x1]
    %v1105 = vld [vmem:[%s3 + $0x2] sm:$0x1]
    %v1106 = vld [vmem:[%s3 + $0x3] sm:$0x1]
    %v1107 = vld [vmem:[%s3 + $0x4] sm:$0x1]
    %v1108 = vld [vmem:[%s3 + $0x5] sm:$0x1]
    %v1109 = vld [vmem:[%s3 + $0x6] sm:$0x1]
    %v1110 = vld [vmem:[%s3 + $0x7] sm:$0x1]
    %v1111 = vadd.f32 %v1095, %v1103
    %v1112 = vadd.f32 %v1096, %v1104
    %v1113 = vadd.f32 %v1097, %v1105
    %v1114 = vadd.f32 %v1098, %v1106
    %v1115 = vadd.f32 %v1099, %v1107
    %v1116 = vadd.f32 %v1100, %v1108
    %v1117 = vadd.f32 %v1101, %v1109
    %v1118 = vadd.f32 %v1102, %v1110
    %vm1119 = vcmask 188416
    %v1120 = vsel %vm1119, %v1111, -inf
    %1121 = vmax.xlane.f32.xlu0 %v1120
    %v1122 = vpop.xlane.xlu0 %1121
    %v1123 = vsel %vm1119, %v1112, -inf
    %1124 = vmax.xlane.f32.xlu0 %v1123
    %v1125 = vpop.xlane.xlu0 %1124
    %v1126 = vsel %vm1119, %v1113, -inf
    %1127 = vmax.xlane.f32.xlu0 %v1126
    %v1128 = vpop.xlane.xlu0 %1127
    %v1129 = vsel %vm1119, %v1114, -inf
    %1130 = vmax.xlane.f32.xlu0 %v1129
    %v1131 = vpop.xlane.xlu0 %1130
    %v1132 = vsel %vm1119, %v1115, -inf
    %1133 = vmax.xlane.f32.xlu0 %v1132
    %v1134 = vpop.xlane.xlu0 %1133
    %v1135 = vsel %vm1119, %v1116, -inf
    %1136 = vmax.xlane.f32.xlu0 %v1135
    %v1137 = vpop.xlane.xlu0 %1136
    %v1138 = vsel %vm1119, %v1117, -inf
    %1139 = vmax.xlane.f32.xlu0 %v1138
    %v1140 = vpop.xlane.xlu0 %1139
    %v1141 = vsel %vm1119, %v1118, -inf
    %1142 = vmax.xlane.f32.xlu0 %v1141
    %v1143 = vpop.xlane.xlu0 %1142
    %v1144 = vsub.f32 %v1111, %v1122
    %v1145 = vsub.f32 %v1112, %v1125
    %v1146 = vsub.f32 %v1113, %v1128
    %v1147 = vsub.f32 %v1114, %v1131
    %v1148 = vsub.f32 %v1115, %v1134
    %v1149 = vsub.f32 %v1116, %v1137
    %v1150 = vsub.f32 %v1117, %v1140
    %v1151 = vsub.f32 %v1118, %v1143
    %v1152 = vmul.f32 %v1144, 1.442695
    %v1153 = vpow.pop %v1152
    %v1154 = vmul.f32 %v1145, 1.442695
    %v1155 = vpow.pop %v1154
    %v1156 = vmul.f32 %v1146, 1.442695
    %v1157 = vpow.pop %v1156
    %v1158 = vmul.f32 %v1147, 1.442695
    %v1159 = vpow.pop %v1158
    %v1160 = vmul.f32 %v1148, 1.442695
    %v1161 = vpow.pop %v1160
    %v1162 = vmul.f32 %v1149, 1.442695
    %v1163 = vpow.pop %v1162
    %v1164 = vmul.f32 %v1150, 1.442695
    %v1165 = vpow.pop %v1164
    %v1166 = vmul.f32 %v1151, 1.442695
    %v1167 = vpow.pop %v1166
    %v1168 = vsel %vm1119, %v1153, 0.0
    %1169 = vadd.xlane.f32.xlu0 %v1168
    %v1170 = vpop.xlane.xlu0 %1169
    %v1171 = vsel %vm1119, %v1155, 0.0
    %1172 = vadd.xlane.f32.xlu0 %v1171
    %v1173 = vpop.xlane.xlu0 %1172
    %v1174 = vsel %vm1119, %v1157, 0.0
    %1175 = vadd.xlane.f32.xlu0 %v1174
    %v1176 = vpop.xlane.xlu0 %1175
    %v1177 = vsel %vm1119, %v1159, 0.0
    %1178 = vadd.xlane.f32.xlu0 %v1177
    %v1179 = vpop.xlane.xlu0 %1178
    %v1180 = vsel %vm1119, %v1161, 0.0
    %1181 = vadd.xlane.f32.xlu0 %v1180
    %v1182 = vpop.xlane.xlu0 %1181
    %v1183 = vsel %vm1119, %v1163, 0.0
    %1184 = vadd.xlane.f32.xlu0 %v1183
    %v1185 = vpop.xlane.xlu0 %1184
    %v1186 = vsel %vm1119, %v1165, 0.0
    %1187 = vadd.xlane.f32.xlu0 %v1186
    %v1188 = vpop.xlane.xlu0 %1187
    %v1189 = vsel %vm1119, %v1167, 0.0
    %1190 = vadd.xlane.f32.xlu0 %v1189
    %v1191 = vpop.xlane.xlu0 %1190
    %v1192 = vrcp.pop %v1170
    %v1193 = vrcp.pop %v1173
    %v1194 = vrcp.pop %v1176
    %v1195 = vrcp.pop %v1179
    %v1196 = vrcp.pop %v1182
    %v1197 = vrcp.pop %v1185
    %v1198 = vrcp.pop %v1188
    %v1199 = vrcp.pop %v1191
    %v1200 = vmul.f32 %v1153, %v1192
    %v1201 = vmul.f32 %v1155, %v1193
    %v1202 = vmul.f32 %v1157, %v1194
    %v1203 = vmul.f32 %v1159, %v1195
    %v1204 = vmul.f32 %v1161, %v1196
    %v1205 = vmul.f32 %v1163, %v1197
    %v1206 = vmul.f32 %v1165, %v1198
    %v1207 = vmul.f32 %v1167, %v1199
    %vm1208 = vcmask 195584
    %v1210 = vsel %vm1208, %v1200, 0
    %1212 = vmatprep.subr.mxu0 0.0
    %1213 = vmatpush1.msra.mxu0 %v206
    %1214 = vmatprep.subr.mxu0 0.0
    %1215 = vmatpush1.msra.mxu0 %v207
    %1216 = vmatprep.subr.mxu0 0.0
    %1217 = vmatpush1.msra.mxu0 %v208
    %1218 = vmatprep.subr.mxu0 0.0
    %1219 = vmatpush1.msra.mxu0 0.0
    %1220 = vmatprep.subr.mxu0 0.0
    %1221 = vmatpush1.msra.mxu0 0.0
    %1222 = vmatprep.subr.mxu0 0.0
    %1223 = vmatpush1.msra.mxu0 0.0
    %1224 = vmatprep.subr.mxu0 0.0
    %1225 = vmatpush1.msra.mxu0 0.0
    %1226 = vmatprep.subr.mxu0 0.0
    %1227 = vmatpush1.msra.mxu0 0.0
    %1228 = vmatprep.subr.mxu0 0.0
    %1229 = vmatpush1.msra.mxu0 0.0
    %1230 = vmatprep.subr.mxu0 0.0
    %1231 = vmatpush1.msra.mxu0 0.0
    %1232 = vmatprep.subr.mxu0 0.0
    %1233 = vmatpush1.msra.mxu0 0.0
    %1234 = vmatprep.subr.mxu0 0.0
    %1235 = vmatpush1.msra.mxu0 0.0
    %1236 = vmatprep.subr.mxu0 0.0
    %1237 = vmatpush1.msra.mxu0 0.0
    %1238 = vmatprep.subr.mxu0 0.0
    %1239 = vmatpush1.msra.mxu0 0.0
    %1240 = vmatprep.subr.mxu0 0.0
    %1241 = vmatpush1.msra.mxu0 0.0
    %1242 = vmatprep.subr.mxu0 0.0
    %1243 = vmatpush1.msra.mxu0 0.0
    %1244 = vmatprep.subr.mxu0 0.0
    %1245 = vmatpush1.msra.mxu0 0.0
    %1246 = vmatprep.subr.mxu0 0.0
    %1247 = vmatpush1.msra.mxu0 0.0
    %1248 = vmatprep.subr.mxu0 0.0
    %1249 = vmatpush1.msra.mxu0 0.0
    %1250 = vmatprep.subr.mxu0 0.0
    %1251 = vmatpush1.msra.mxu0 0.0
    %1252 = vmatprep.subr.mxu0 0.0
    %1253 = vmatpush1.msra.mxu0 0.0
    %1254 = vmatprep.subr.mxu0 0.0
    %1255 = vmatpush1.msra.mxu0 0.0
    %1256 = vmatprep.subr.mxu0 0.0
    %1257 = vmatpush1.msra.mxu0 0.0
    %1258 = vmatprep.subr.mxu0 0.0
    %1259 = vmatpush1.msra.mxu0 0.0
    %1260 = vmatprep.subr.mxu0 0.0
    %1261 = vmatpush1.msra.mxu0 0.0
    %1262 = vmatprep.subr.mxu0 0.0
    %1263 = vmatpush1.msra.mxu0 0.0
    %1264 = vmatprep.subr.mxu0 0.0
    %1265 = vmatpush1.msra.mxu0 0.0
    %1266 = vmatprep.subr.mxu0 0.0
    %1267 = vmatpush1.msra.mxu0 0.0
    %1268 = vmatprep.subr.mxu0 0.0
    %1269 = vmatpush1.msra.mxu0 0.0
    %1270 = vmatprep.subr.mxu0 0.0
    %1271 = vmatpush1.msra.mxu0 0.0
    %1272 = vmatprep.subr.mxu0 0.0
    %1273 = vmatpush1.msra.mxu0 0.0
    %1274 = vmatprep.subr.mxu0 0.0
    %1275 = vmatpush1.msra.mxu0 0.0
    %1276 = vmatprep.mubr.f32.mxu0 0.0
    %1277 = vmatmul.mubr.f32.gmra.mrb[0].mxu0 %v1210
    %v1278 = vpop.f32.mrb[0].mxu0
    %v1279 = vadd.f32 0.0, %v1278
    %v1280 = vpop.f32.mrb[0].mxu0
    %1281 = vdwg.mxu0
    %v1283 = vsel %vm1208, %v1201, 0
    %1285 = vmatprep.subr.mxu0 0.0
    %1286 = vmatpush1.msra.mxu0 %v209
    %1287 = vmatprep.subr.mxu0 0.0
    %1288 = vmatpush1.msra.mxu0 %v210
    %1289 = vmatprep.subr.mxu0 0.0
    %1290 = vmatpush1.msra.mxu0 %v211
    %1291 = vmatprep.subr.mxu0 0.0
    %1292 = vmatpush1.msra.mxu0 0.0
    %1293 = vmatprep.subr.mxu0 0.0
    %1294 = vmatpush1.msra.mxu0 0.0
    %1295 = vmatprep.subr.mxu0 0.0
    %1296 = vmatpush1.msra.mxu0 0.0
    %1297 = vmatprep.subr.mxu0 0.0
    %1298 = vmatpush1.msra.mxu0 0.0
    %1299 = vmatprep.subr.mxu0 0.0
    %1300 = vmatpush1.msra.mxu0 0.0
    %1301 = vmatprep.subr.mxu0 0.0
    %1302 = vmatpush1.msra.mxu0 0.0
    %1303 = vmatprep.subr.mxu0 0.0
    %1304 = vmatpush1.msra.mxu0 0.0
    %1305 = vmatprep.subr.mxu0 0.0
    %1306 = vmatpush1.msra.mxu0 0.0
    %1307 = vmatprep.subr.mxu0 0.0
    %1308 = vmatpush1.msra.mxu0 0.0
    %1309 = vmatprep.subr.mxu0 0.0
    %1310 = vmatpush1.msra.mxu0 0.0
    %1311 = vmatprep.subr.mxu0 0.0
    %1312 = vmatpush1.msra.mxu0 0.0
    %1313 = vmatprep.subr.mxu0 0.0
    %1314 = vmatpush1.msra.mxu0 0.0
    %1315 = vmatprep.subr.mxu0 0.0
    %1316 = vmatpush1.msra.mxu0 0.0
    %1317 = vmatprep.subr.mxu0 0.0
    %1318 = vmatpush1.msra.mxu0 0.0
    %1319 = vmatprep.subr.mxu0 0.0
    %1320 = vmatpush1.msra.mxu0 0.0
    %1321 = vmatprep.subr.mxu0 0.0
    %1322 = vmatpush1.msra.mxu0 0.0
    %1323 = vmatprep.subr.mxu0 0.0
    %1324 = vmatpush1.msra.mxu0 0.0
    %1325 = vmatprep.subr.mxu0 0.0
    %1326 = vmatpush1.msra.mxu0 0.0
    %1327 = vmatprep.subr.mxu0 0.0
    %1328 = vmatpush1.msra.mxu0 0.0
    %1329 = vmatprep.subr.mxu0 0.0
    %1330 = vmatpush1.msra.mxu0 0.0
    %1331 = vmatprep.subr.mxu0 0.0
    %1332 = vmatpush1.msra.mxu0 0.0
    %1333 = vmatprep.subr.mxu0 0.0
    %1334 = vmatpush1.msra.mxu0 0.0
    %1335 = vmatprep.subr.mxu0 0.0
    %1336 = vmatpush1.msra.mxu0 0.0
    %1337 = vmatprep.subr.mxu0 0.0
    %1338 = vmatpush1.msra.mxu0 0.0
    %1339 = vmatprep.subr.mxu0 0.0
    %1340 = vmatpush1.msra.mxu0 0.0
    %1341 = vmatprep.subr.mxu0 0.0
    %1342 = vmatpush1.msra.mxu0 0.0
    %1343 = vmatprep.subr.mxu0 0.0
    %1344 = vmatpush1.msra.mxu0 0.0
    %1345 = vmatprep.subr.mxu0 0.0
    %1346 = vmatpush1.msra.mxu0 0.0
    %1347 = vmatprep.subr.mxu0 0.0
    %1348 = vmatpush1.msra.mxu0 0.0
    %1349 = vmatprep.mubr.f32.mxu0 0.0
    %1350 = vmatmul.mubr.f32.gmra.mrb[0].mxu0 %v1283
    %v1351 = vpop.f32.mrb[0].mxu0
    %v1352 = vadd.f32 0.0, %v1351
    %v1353 = vpop.f32.mrb[0].mxu0
    %1354 = vdwg.mxu0
    %v1356 = vsel %vm1208, %v1202, 0
    %1358 = vmatprep.subr.mxu0 0.0
    %1359 = vmatpush1.msra.mxu0 %v212
    %1360 = vmatprep.subr.mxu0 0.0
    %1361 = vmatpush1.msra.mxu0 %v213
    %1362 = vmatprep.subr.mxu0 0.0
    %1363 = vmatpush1.msra.mxu0 %v214
    %1364 = vmatprep.subr.mxu0 0.0
    %1365 = vmatpush1.msra.mxu0 0.0
    %1366 = vmatprep.subr.mxu0 0.0
    %1367 = vmatpush1.msra.mxu0 0.0
    %1368 = vmatprep.subr.mxu0 0.0
    %1369 = vmatpush1.msra.mxu0 0.0
    %1370 = vmatprep.subr.mxu0 0.0
    %1371 = vmatpush1.msra.mxu0 0.0
    %1372 = vmatprep.subr.mxu0 0.0
    %1373 = vmatpush1.msra.mxu0 0.0
    %1374 = vmatprep.subr.mxu0 0.0
    %1375 = vmatpush1.msra.mxu0 0.0
    %1376 = vmatprep.subr.mxu0 0.0
    %1377 = vmatpush1.msra.mxu0 0.0
    %1378 = vmatprep.subr.mxu0 0.0
    %1379 = vmatpush1.msra.mxu0 0.0
    %1380 = vmatprep.subr.mxu0 0.0
    %1381 = vmatpush1.msra.mxu0 0.0
    %1382 = vmatprep.subr.mxu0 0.0
    %1383 = vmatpush1.msra.mxu0 0.0
    %1384 = vmatprep.subr.mxu0 0.0
    %1385 = vmatpush1.msra.mxu0 0.0
    %1386 = vmatprep.subr.mxu0 0.0
    %1387 = vmatpush1.msra.mxu0 0.0
    %1388 = vmatprep.subr.mxu0 0.0
    %1389 = vmatpush1.msra.mxu0 0.0
    %1390 = vmatprep.subr.mxu0 0.0
    %1391 = vmatpush1.msra.mxu0 0.0
    %1392 = vmatprep.subr.mxu0 0.0
    %1393 = vmatpush1.msra.mxu0 0.0
    %1394 = vmatprep.subr.mxu0 0.0
    %1395 = vmatpush1.msra.mxu0 0.0
    %1396 = vmatprep.subr.mxu0 0.0
    %1397 = vmatpush1.msra.mxu0 0.0
    %1398 = vmatprep.subr.mxu0 0.0
    %1399 = vmatpush1.msra.mxu0 0.0
    %1400 = vmatprep.subr.mxu0 0.0
    %1401 = vmatpush1.msra.mxu0 0.0
    %1402 = vmatprep.subr.mxu0 0.0
    %1403 = vmatpush1.msra.mxu0 0.0
    %1404 = vmatprep.subr.mxu0 0.0
    %1405 = vmatpush1.msra.mxu0 0.0
    %1406 = vmatprep.subr.mxu0 0.0
    %1407 = vmatpush1.msra.mxu0 0.0
    %1408 = vmatprep.subr.mxu0 0.0
    %1409 = vmatpush1.msra.mxu0 0.0
    %1410 = vmatprep.subr.mxu0 0.0
    %1411 = vmatpush1.msra.mxu0 0.0
    %1412 = vmatprep.subr.mxu0 0.0
    %1413 = vmatpush1.msra.mxu0 0.0
    %1414 = vmatprep.subr.mxu0 0.0
    %1415 = vmatpush1.msra.mxu0 0.0
    %1416 = vmatprep.subr.mxu0 0.0
    %1417 = vmatpush1.msra.mxu0 0.0
    %1418 = vmatprep.subr.mxu0 0.0
    %1419 = vmatpush1.msra.mxu0 0.0
    %1420 = vmatprep.subr.mxu0 0.0
    %1421 = vmatpush1.msra.mxu0 0.0
    %1422 = vmatprep.mubr.f32.mxu0 0.0
    %1423 = vmatmul.mubr.f32.gmra.mrb[0].mxu0 %v1356
    %v1424 = vpop.f32.mrb[0].mxu0
    %v1425 = vadd.f32 0.0, %v1424
    %v1426 = vpop.f32.mrb[0].mxu0
    %1427 = vdwg.mxu0
    %v1429 = vsel %vm1208, %v1203, 0
    %1431 = vmatprep.subr.mxu0 0.0
    %1432 = vmatpush1.msra.mxu0 %v215
    %1433 = vmatprep.subr.mxu0 0.0
    %1434 = vmatpush1.msra.mxu0 %v216
    %1435 = vmatprep.subr.mxu0 0.0
    %1436 = vmatpush1.msra.mxu0 %v217
    %1437 = vmatprep.subr.mxu0 0.0
    %1438 = vmatpush1.msra.mxu0 0.0
    %1439 = vmatprep.subr.mxu0 0.0
    %1440 = vmatpush1.msra.mxu0 0.0
    %1441 = vmatprep.subr.mxu0 0.0
    %1442 = vmatpush1.msra.mxu0 0.0
    %1443 = vmatprep.subr.mxu0 0.0
    %1444 = vmatpush1.msra.mxu0 0.0
    %1445 = vmatprep.subr.mxu0 0.0
    %1446 = vmatpush1.msra.mxu0 0.0
    %1447 = vmatprep.subr.mxu0 0.0
    %1448 = vmatpush1.msra.mxu0 0.0
    %1449 = vmatprep.subr.mxu0 0.0
    %1450 = vmatpush1.msra.mxu0 0.0
    %1451 = vmatprep.subr.mxu0 0.0
    %1452 = vmatpush1.msra.mxu0 0.0
    %1453 = vmatprep.subr.mxu0 0.0
    %1454 = vmatpush1.msra.mxu0 0.0
    %1455 = vmatprep.subr.mxu0 0.0
    %1456 = vmatpush1.msra.mxu0 0.0
    %1457 = vmatprep.subr.mxu0 0.0
    %1458 = vmatpush1.msra.mxu0 0.0
    %1459 = vmatprep.subr.mxu0 0.0
    %1460 = vmatpush1.msra.mxu0 0.0
    %1461 = vmatprep.subr.mxu0 0.0
    %1462 = vmatpush1.msra.mxu0 0.0
    %1463 = vmatprep.subr.mxu0 0.0
    %1464 = vmatpush1.msra.mxu0 0.0
    %1465 = vmatprep.subr.mxu0 0.0
    %1466 = vmatpush1.msra.mxu0 0.0
    %1467 = vmatprep.subr.mxu0 0.0
    %1468 = vmatpush1.msra.mxu0 0.0
    %1469 = vmatprep.subr.mxu0 0.0
    %1470 = vmatpush1.msra.mxu0 0.0
    %1471 = vmatprep.subr.mxu0 0.0
    %1472 = vmatpush1.msra.mxu0 0.0
    %1473 = vmatprep.subr.mxu0 0.0
    %1474 = vmatpush1.msra.mxu0 0.0
    %1475 = vmatprep.subr.mxu0 0.0
    %1476 = vmatpush1.msra.mxu0 0.0
    %1477 = vmatprep.subr.mxu0 0.0
    %1478 = vmatpush1.msra.mxu0 0.0
    %1479 = vmatprep.subr.mxu0 0.0
    %1480 = vmatpush1.msra.mxu0 0.0
    %1481 = vmatprep.subr.mxu0 0.0
    %1482 = vmatpush1.msra.mxu0 0.0
    %1483 = vmatprep.subr.mxu0 0.0
    %1484 = vmatpush1.msra.mxu0 0.0
    %1485 = vmatprep.subr.mxu0 0.0
    %1486 = vmatpush1.msra.mxu0 0.0
    %1487 = vmatprep.subr.mxu0 0.0
    %1488 = vmatpush1.msra.mxu0 0.0
    %1489 = vmatprep.subr.mxu0 0.0
    %1490 = vmatpush1.msra.mxu0 0.0
    %1491 = vmatprep.subr.mxu0 0.0
    %1492 = vmatpush1.msra.mxu0 0.0
    %1493 = vmatprep.subr.mxu0 0.0
    %1494 = vmatpush1.msra.mxu0 0.0
    %1495 = vmatprep.mubr.f32.mxu0 0.0
    %1496 = vmatmul.mubr.f32.gmra.mrb[0].mxu0 %v1429
    %v1497 = vpop.f32.mrb[0].mxu0
    %v1498 = vadd.f32 0.0, %v1497
    %v1499 = vpop.f32.mrb[0].mxu0
    %1500 = vdwg.mxu0
    %v1502 = vsel %vm1208, %v1204, 0
    %1504 = vmatprep.subr.mxu0 0.0
    %1505 = vmatpush1.msra.mxu0 %v218
    %1506 = vmatprep.subr.mxu0 0.0
    %1507 = vmatpush1.msra.mxu0 %v219
    %1508 = vmatprep.subr.mxu0 0.0
    %1509 = vmatpush1.msra.mxu0 %v220
    %1510 = vmatprep.subr.mxu0 0.0
    %1511 = vmatpush1.msra.mxu0 0.0
    %1512 = vmatprep.subr.mxu0 0.0
    %1513 = vmatpush1.msra.mxu0 0.0
    %1514 = vmatprep.subr.mxu0 0.0
    %1515 = vmatpush1.msra.mxu0 0.0
    %1516 = vmatprep.subr.mxu0 0.0
    %1517 = vmatpush1.msra.mxu0 0.0
    %1518 = vmatprep.subr.mxu0 0.0
    %1519 = vmatpush1.msra.mxu0 0.0
    %1520 = vmatprep.subr.mxu0 0.0
    %1521 = vmatpush1.msra.mxu0 0.0
    %1522 = vmatprep.subr.mxu0 0.0
    %1523 = vmatpush1.msra.mxu0 0.0
    %1524 = vmatprep.subr.mxu0 0.0
    %1525 = vmatpush1.msra.mxu0 0.0
    %1526 = vmatprep.subr.mxu0 0.0
    %1527 = vmatpush1.msra.mxu0 0.0
    %1528 = vmatprep.subr.mxu0 0.0
    %1529 = vmatpush1.msra.mxu0 0.0
    %1530 = vmatprep.subr.mxu0 0.0
    %1531 = vmatpush1.msra.mxu0 0.0
    %1532 = vmatprep.subr.mxu0 0.0
    %1533 = vmatpush1.msra.mxu0 0.0
    %1534 = vmatprep.subr.mxu0 0.0
    %1535 = vmatpush1.msra.mxu0 0.0
    %1536 = vmatprep.subr.mxu0 0.0
    %1537 = vmatpush1.msra.mxu0 0.0
    %1538 = vmatprep.subr.mxu0 0.0
    %1539 = vmatpush1.msra.mxu0 0.0
    %1540 = vmatprep.subr.mxu0 0.0
    %1541 = vmatpush1.msra.mxu0 0.0
    %1542 = vmatprep.subr.mxu0 0.0
    %1543 = vmatpush1.msra.mxu0 0.0
    %1544 = vmatprep.subr.mxu0 0.0
    %1545 = vmatpush1.msra.mxu0 0.0
    %1546 = vmatprep.subr.mxu0 0.0
    %1547 = vmatpush1.msra.mxu0 0.0
    %1548 = vmatprep.subr.mxu0 0.0
    %1549 = vmatpush1.msra.mxu0 0.0
    %1550 = vmatprep.subr.mxu0 0.0
    %1551 = vmatpush1.msra.mxu0 0.0
    %1552 = vmatprep.subr.mxu0 0.0
    %1553 = vmatpush1.msra.mxu0 0.0
    %1554 = vmatprep.subr.mxu0 0.0
    %1555 = vmatpush1.msra.mxu0 0.0
    %1556 = vmatprep.subr.mxu0 0.0
    %1557 = vmatpush1.msra.mxu0 0.0
    %1558 = vmatprep.subr.mxu0 0.0
    %1559 = vmatpush1.msra.mxu0 0.0
    %1560 = vmatprep.subr.mxu0 0.0
    %1561 = vmatpush1.msra.mxu0 0.0
    %1562 = vmatprep.subr.mxu0 0.0
    %1563 = vmatpush1.msra.mxu0 0.0
    %1564 = vmatprep.subr.mxu0 0.0
    %1565 = vmatpush1.msra.mxu0 0.0
    %1566 = vmatprep.subr.mxu0 0.0
    %1567 = vmatpush1.msra.mxu0 0.0
    %1568 = vmatprep.mubr.f32.mxu0 0.0
    %1569 = vmatmul.mubr.f32.gmra.mrb[0].mxu0 %v1502
    %v1570 = vpop.f32.mrb[0].mxu0
    %v1571 = vadd.f32 0.0, %v1570
    %v1572 = vpop.f32.mrb[0].mxu0
    %1573 = vdwg.mxu0
    %v1575 = vsel %vm1208, %v1205, 0
    %1577 = vmatprep.subr.mxu0 0.0
    %1578 = vmatpush1.msra.mxu0 %v221
    %1579 = vmatprep.subr.mxu0 0.0
    %1580 = vmatpush1.msra.mxu0 %v222
    %1581 = vmatprep.subr.mxu0 0.0
    %1582 = vmatpush1.msra.mxu0 %v223
    %1583 = vmatprep.subr.mxu0 0.0
    %1584 = vmatpush1.msra.mxu0 0.0
    %1585 = vmatprep.subr.mxu0 0.0
    %1586 = vmatpush1.msra.mxu0 0.0
    %1587 = vmatprep.subr.mxu0 0.0
    %1588 = vmatpush1.msra.mxu0 0.0
    %1589 = vmatprep.subr.mxu0 0.0
    %1590 = vmatpush1.msra.mxu0 0.0
    %1591 = vmatprep.subr.mxu0 0.0
    %1592 = vmatpush1.msra.mxu0 0.0
    %1593 = vmatprep.subr.mxu0 0.0
    %1594 = vmatpush1.msra.mxu0 0.0
    %1595 = vmatprep.subr.mxu0 0.0
    %1596 = vmatpush1.msra.mxu0 0.0
    %1597 = vmatprep.subr.mxu0 0.0
    %1598 = vmatpush1.msra.mxu0 0.0
    %1599 = vmatprep.subr.mxu0 0.0
    %1600 = vmatpush1.msra.mxu0 0.0
    %1601 = vmatprep.subr.mxu0 0.0
    %1602 = vmatpush1.msra.mxu0 0.0
    %1603 = vmatprep.subr.mxu0 0.0
    %1604 = vmatpush1.msra.mxu0 0.0
    %1605 = vmatprep.subr.mxu0 0.0
    %1606 = vmatpush1.msra.mxu0 0.0
    %1607 = vmatprep.subr.mxu0 0.0
    %1608 = vmatpush1.msra.mxu0 0.0
    %1609 = vmatprep.subr.mxu0 0.0
    %1610 = vmatpush1.msra.mxu0 0.0
    %1611 = vmatprep.subr.mxu0 0.0
    %1612 = vmatpush1.msra.mxu0 0.0
    %1613 = vmatprep.subr.mxu0 0.0
    %1614 = vmatpush1.msra.mxu0 0.0
    %1615 = vmatprep.subr.mxu0 0.0
    %1616 = vmatpush1.msra.mxu0 0.0
    %1617 = vmatprep.subr.mxu0 0.0
    %1618 = vmatpush1.msra.mxu0 0.0
    %1619 = vmatprep.subr.mxu0 0.0
    %1620 = vmatpush1.msra.mxu0 0.0
    %1621 = vmatprep.subr.mxu0 0.0
    %1622 = vmatpush1.msra.mxu0 0.0
    %1623 = vmatprep.subr.mxu0 0.0
    %1624 = vmatpush1.msra.mxu0 0.0
    %1625 = vmatprep.subr.mxu0 0.0
    %1626 = vmatpush1.msra.mxu0 0.0
    %1627 = vmatprep.subr.mxu0 0.0
    %1628 = vmatpush1.msra.mxu0 0.0
    %1629 = vmatprep.subr.mxu0 0.0
    %1630 = vmatpush1.msra.mxu0 0.0
    %1631 = vmatprep.subr.mxu0 0.0
    %1632 = vmatpush1.msra.mxu0 0.0
    %1633 = vmatprep.subr.mxu0 0.0
    %1634 = vmatpush1.msra.mxu0 0.0
    %1635 = vmatprep.subr.mxu0 0.0
    %1636 = vmatpush1.msra.mxu0 0.0
    %1637 = vmatprep.subr.mxu0 0.0
    %1638 = vmatpush1.msra.mxu0 0.0
    %1639 = vmatprep.subr.mxu0 0.0
    %1640 = vmatpush1.msra.mxu0 0.0
    %1641 = vmatprep.mubr.f32.mxu0 0.0
    %1642 = vmatmul.mubr.f32.gmra.mrb[0].mxu0 %v1575
    %v1643 = vpop.f32.mrb[0].mxu0
    %v1644 = vadd.f32 0.0, %v1643
    %v1645 = vpop.f32.mrb[0].mxu0
    %1646 = vdwg.mxu0
    %v1648 = vsel %vm1208, %v1206, 0
    %1650 = vmatprep.subr.mxu0 0.0
    %1651 = vmatpush1.msra.mxu0 %v224
    %1652 = vmatprep.subr.mxu0 0.0
    %1653 = vmatpush1.msra.mxu0 %v225
    %1654 = vmatprep.subr.mxu0 0.0
    %1655 = vmatpush1.msra.mxu0 %v226
    %1656 = vmatprep.subr.mxu0 0.0
    %1657 = vmatpush1.msra.mxu0 0.0
    %1658 = vmatprep.subr.mxu0 0.0
    %1659 = vmatpush1.msra.mxu0 0.0
    %1660 = vmatprep.subr.mxu0 0.0
    %1661 = vmatpush1.msra.mxu0 0.0
    %1662 = vmatprep.subr.mxu0 0.0
    %1663 = vmatpush1.msra.mxu0 0.0
    %1664 = vmatprep.subr.mxu0 0.0
    %1665 = vmatpush1.msra.mxu0 0.0
    %1666 = vmatprep.subr.mxu0 0.0
    %1667 = vmatpush1.msra.mxu0 0.0
    %1668 = vmatprep.subr.mxu0 0.0
    %1669 = vmatpush1.msra.mxu0 0.0
    %1670 = vmatprep.subr.mxu0 0.0
    %1671 = vmatpush1.msra.mxu0 0.0
    %1672 = vmatprep.subr.mxu0 0.0
    %1673 = vmatpush1.msra.mxu0 0.0
    %1674 = vmatprep.subr.mxu0 0.0
    %1675 = vmatpush1.msra.mxu0 0.0
    %1676 = vmatprep.subr.mxu0 0.0
    %1677 = vmatpush1.msra.mxu0 0.0
    %1678 = vmatprep.subr.mxu0 0.0
    %1679 = vmatpush1.msra.mxu0 0.0
    %1680 = vmatprep.subr.mxu0 0.0
    %1681 = vmatpush1.msra.mxu0 0.0
    %1682 = vmatprep.subr.mxu0 0.0
    %1683 = vmatpush1.msra.mxu0 0.0
    %1684 = vmatprep.subr.mxu0 0.0
    %1685 = vmatpush1.msra.mxu0 0.0
    %1686 = vmatprep.subr.mxu0 0.0
    %1687 = vmatpush1.msra.mxu0 0.0
    %1688 = vmatprep.subr.mxu0 0.0
    %1689 = vmatpush1.msra.mxu0 0.0
    %1690 = vmatprep.subr.mxu0 0.0
    %1691 = vmatpush1.msra.mxu0 0.0
    %1692 = vmatprep.subr.mxu0 0.0
    %1693 = vmatpush1.msra.mxu0 0.0
    %1694 = vmatprep.subr.mxu0 0.0
    %1695 = vmatpush1.msra.mxu0 0.0
    %1696 = vmatprep.subr.mxu0 0.0
    %1697 = vmatpush1.msra.mxu0 0.0
    %1698 = vmatprep.subr.mxu0 0.0
    %1699 = vmatpush1.msra.mxu0 0.0
    %1700 = vmatprep.subr.mxu0 0.0
    %1701 = vmatpush1.msra.mxu0 0.0
    %1702 = vmatprep.subr.mxu0 0.0
    %1703 = vmatpush1.msra.mxu0 0.0
    %1704 = vmatprep.subr.mxu0 0.0
    %1705 = vmatpush1.msra.mxu0 0.0
    %1706 = vmatprep.subr.mxu0 0.0
    %1707 = vmatpush1.msra.mxu0 0.0
    %1708 = vmatprep.subr.mxu0 0.0
    %1709 = vmatpush1.msra.mxu0 0.0
    %1710 = vmatprep.subr.mxu0 0.0
    %1711 = vmatpush1.msra.mxu0 0.0
    %1712 = vmatprep.subr.mxu0 0.0
    %1713 = vmatpush1.msra.mxu0 0.0
    %1714 = vmatprep.mubr.f32.mxu0 0.0
    %1715 = vmatmul.mubr.f32.gmra.mrb[0].mxu0 %v1648
    %v1716 = vpop.f32.mrb[0].mxu0
    %v1717 = vadd.f32 0.0, %v1716
    %v1718 = vpop.f32.mrb[0].mxu0
    %1719 = vdwg.mxu0
    %v1721 = vsel %vm1208, %v1207, 0
    %1723 = vmatprep.subr.mxu0 0.0
    %1724 = vmatpush1.msra.mxu0 %v227
    %1725 = vmatprep.subr.mxu0 0.0
    %1726 = vmatpush1.msra.mxu0 %v228
    %1727 = vmatprep.subr.mxu0 0.0
    %1728 = vmatpush1.msra.mxu0 %v229
    %1729 = vmatprep.subr.mxu0 0.0
    %1730 = vmatpush1.msra.mxu0 0.0
    %1731 = vmatprep.subr.mxu0 0.0
    %1732 = vmatpush1.msra.mxu0 0.0
    %1733 = vmatprep.subr.mxu0 0.0
    %1734 = vmatpush1.msra.mxu0 0.0
    %1735 = vmatprep.subr.mxu0 0.0
    %1736 = vmatpush1.msra.mxu0 0.0
    %1737 = vmatprep.subr.mxu0 0.0
    %1738 = vmatpush1.msra.mxu0 0.0
    %1739 = vmatprep.subr.mxu0 0.0
    %1740 = vmatpush1.msra.mxu0 0.0
    %1741 = vmatprep.subr.mxu0 0.0
    %1742 = vmatpush1.msra.mxu0 0.0
    %1743 = vmatprep.subr.mxu0 0.0
    %1744 = vmatpush1.msra.mxu0 0.0
    %1745 = vmatprep.subr.mxu0 0.0
    %1746 = vmatpush1.msra.mxu0 0.0
    %1747 = vmatprep.subr.mxu0 0.0
    %1748 = vmatpush1.msra.mxu0 0.0
    %1749 = vmatprep.subr.mxu0 0.0
    %1750 = vmatpush1.msra.mxu0 0.0
    %1751 = vmatprep.subr.mxu0 0.0
    %1752 = vmatpush1.msra.mxu0 0.0
    %1753 = vmatprep.subr.mxu0 0.0
    %1754 = vmatpush1.msra.mxu0 0.0
    %1755 = vmatprep.subr.mxu0 0.0
    %1756 = vmatpush1.msra.mxu0 0.0
    %1757 = vmatprep.subr.mxu0 0.0
    %1758 = vmatpush1.msra.mxu0 0.0
    %1759 = vmatprep.subr.mxu0 0.0
    %1760 = vmatpush1.msra.mxu0 0.0
    %1761 = vmatprep.subr.mxu0 0.0
    %1762 = vmatpush1.msra.mxu0 0.0
    %1763 = vmatprep.subr.mxu0 0.0
    %1764 = vmatpush1.msra.mxu0 0.0
    %1765 = vmatprep.subr.mxu0 0.0
    %1766 = vmatpush1.msra.mxu0 0.0
    %1767 = vmatprep.subr.mxu0 0.0
    %1768 = vmatpush1.msra.mxu0 0.0
    %1769 = vmatprep.subr.mxu0 0.0
    %1770 = vmatpush1.msra.mxu0 0.0
    %1771 = vmatprep.subr.mxu0 0.0
    %1772 = vmatpush1.msra.mxu0 0.0
    %1773 = vmatprep.subr.mxu0 0.0
    %1774 = vmatpush1.msra.mxu0 0.0
    %1775 = vmatprep.subr.mxu0 0.0
    %1776 = vmatpush1.msra.mxu0 0.0
    %1777 = vmatprep.subr.mxu0 0.0
    %1778 = vmatpush1.msra.mxu0 0.0
    %1779 = vmatprep.subr.mxu0 0.0
    %1780 = vmatpush1.msra.mxu0 0.0
    %1781 = vmatprep.subr.mxu0 0.0
    %1782 = vmatpush1.msra.mxu0 0.0
    %1783 = vmatprep.subr.mxu0 0.0
    %1784 = vmatpush1.msra.mxu0 0.0
    %1785 = vmatprep.subr.mxu0 0.0
    %1786 = vmatpush1.msra.mxu0 0.0
    %1787 = vmatprep.mubr.f32.mxu0 0.0
    %1788 = vmatmul.mubr.f32.gmra.mrb[0].mxu0 %v1721
    %v1789 = vpop.f32.mrb[0].mxu0
    %v1790 = vadd.f32 0.0, %v1789
    %v1791 = vpop.f32.mrb[0].mxu0
    %1792 = vdwg.mxu0
    %v1801 = vrot.slane %v1352, 7
    %vm1802 = vcmask 1041409
    %v1803 = vsel %vm1802, %v1801, %v1279
    %v1804 = vrot.slane %v1425, 6
    %vm1805 = vcmask 1042434
    %v1806 = vsel %vm1805, %v1804, %v1803
    %v1807 = vrot.slane %v1498, 5
    %vm1808 = vcmask 1043459
    %v1809 = vsel %vm1808, %v1807, %v1806
    %v1810 = vrot.slane %v1571, 4
    %vm1811 = vcmask 1044484
    %v1812 = vsel %vm1811, %v1810, %v1809
    %v1813 = vrot.slane %v1644, 3
    %vm1814 = vcmask 1045509
    %v1815 = vsel %vm1814, %v1813, %v1812
    %v1816 = vrot.slane %v1717, 2
    %vm1817 = vcmask 1046534
    %v1818 = vsel %vm1817, %v1816, %v1815
    %v1819 = vrot.slane %v1790, 1
    %vm1820 = vcmask 1047559
    %v1821 = vsel %vm1820, %v1819, %v1818
    %1822 = vrot.lane.b32.xlu0 %v1821, 64
    %v1823 = vpop.permute.xlu0 %1822
    %vm1825 = vcmask 523264
    %v1826 = vsel %vm1825, %v203, %v1823
    %v1827 = vld [vmem:[#allocation11] sm:$0xff]
    %v1828 = vld [vmem:[#allocation11 + $0x8] sm:$0xff]
    %v1829 = vld [vmem:[#allocation11 + $0x10] sm:$0xff]
    %v1830 = vld [vmem:[#allocation11 + $0x18] sm:$0xff]
    %v1831 = vld [vmem:[#allocation11 + $0x20] sm:$0xff]
    %v1832 = vld [vmem:[#allocation11 + $0x28] sm:$0xff]
    %v1833 = vld [vmem:[#allocation11 + $0x30] sm:$0xff]
    %v1834 = vld [vmem:[#allocation11 + $0x38] sm:$0xff]
    %v1835 = vld [vmem:[#allocation11 + $0x40] sm:$0xff]
    %v1836 = vld [vmem:[#allocation11 + $0x48] sm:$0xff]
    %v1837 = vld [vmem:[#allocation11 + $0x50] sm:$0xff]
    %v1838 = vld [vmem:[#allocation11 + $0x58] sm:$0xff]
    %v1839 = vld [vmem:[#allocation14] sm:$0x1]
    %v1841 = vlaneseq
    %v1842 = vshrl.u32 %v1841, 7
    %v1843 = vsub.s32 0, %v1842
    %v1844 = vrot.slane %v1839, %v1843
    %vm1846 = vcmask 785408
    %v1848 = vsel %vm1846, %v1826, 0
    %1850 = vmatprep.subr.mxu0 0.0
    %1851 = vmatpush1.msra.mxu0 %v1827
    %1852 = vmatprep.subr.mxu0 0.0
    %1853 = vmatpush1.msra.mxu0 %v1828
    %1854 = vmatprep.subr.mxu0 0.0
    %1855 = vmatpush1.msra.mxu0 %v1829
    %1856 = vmatprep.subr.mxu0 0.0
    %1857 = vmatpush1.msra.mxu0 %v1830
    %1858 = vmatprep.subr.mxu0 0.0
    %1859 = vmatpush1.msra.mxu0 %v1831
    %1860 = vmatprep.subr.mxu0 0.0
    %1861 = vmatpush1.msra.mxu0 %v1832
    %1862 = vmatprep.subr.mxu0 0.0
    %1863 = vmatpush1.msra.mxu0 %v1833
    %1864 = vmatprep.subr.mxu0 0.0
    %1865 = vmatpush1.msra.mxu0 %v1834
    %1866 = vmatprep.subr.mxu0 0.0
    %1867 = vmatpush1.msra.mxu0 %v1835
    %1868 = vmatprep.subr.mxu0 0.0
    %1869 = vmatpush1.msra.mxu0 %v1836
    %1870 = vmatprep.subr.mxu0 0.0
    %1871 = vmatpush1.msra.mxu0 %v1837
    %1872 = vmatprep.subr.mxu0 0.0
    %1873 = vmatpush1.msra.mxu0 %v1838
    %1874 = vmatprep.subr.mxu0 0.0
    %1875 = vmatpush1.msra.mxu0 0.0
    %1876 = vmatprep.subr.mxu0 0.0
    %1877 = vmatpush1.msra.mxu0 0.0
    %1878 = vmatprep.subr.mxu0 0.0
    %1879 = vmatpush1.msra.mxu0 0.0
    %1880 = vmatprep.subr.mxu0 0.0
    %1881 = vmatpush1.msra.mxu0 0.0
    %1882 = vmatprep.subr.mxu0 0.0
    %1883 = vmatpush1.msra.mxu0 0.0
    %1884 = vmatprep.subr.mxu0 0.0
    %1885 = vmatpush1.msra.mxu0 0.0
    %1886 = vmatprep.subr.mxu0 0.0
    %1887 = vmatpush1.msra.mxu0 0.0
    %1888 = vmatprep.subr.mxu0 0.0
    %1889 = vmatpush1.msra.mxu0 0.0
    %1890 = vmatprep.subr.mxu0 0.0
    %1891 = vmatpush1.msra.mxu0 0.0
    %1892 = vmatprep.subr.mxu0 0.0
    %1893 = vmatpush1.msra.mxu0 0.0
    %1894 = vmatprep.subr.mxu0 0.0
    %1895 = vmatpush1.msra.mxu0 0.0
    %1896 = vmatprep.subr.mxu0 0.0
    %1897 = vmatpush1.msra.mxu0 0.0
    %1898 = vmatprep.subr.mxu0 0.0
    %1899 = vmatpush1.msra.mxu0 0.0
    %1900 = vmatprep.subr.mxu0 0.0
    %1901 = vmatpush1.msra.mxu0 0.0
    %1902 = vmatprep.subr.mxu0 0.0
    %1903 = vmatpush1.msra.mxu0 0.0
    %1904 = vmatprep.subr.mxu0 0.0
    %1905 = vmatpush1.msra.mxu0 0.0
    %1906 = vmatprep.subr.mxu0 0.0
    %1907 = vmatpush1.msra.mxu0 0.0
    %1908 = vmatprep.subr.mxu0 0.0
    %1909 = vmatpush1.msra.mxu0 0.0
    %1910 = vmatprep.subr.mxu0 0.0
    %1911 = vmatpush1.msra.mxu0 0.0
    %1912 = vmatprep.subr.mxu0 0.0
    %1913 = vmatpush1.msra.mxu0 0.0
    %1914 = vmatprep.mubr.f32.mxu0 0.0
    %1915 = vmatmul.mubr.f32.gmra.mrb[0].mxu0 %v1848
    %v1916 = vpop.f32.mrb[0].mxu0
    %v1917 = vadd.f32 %v1844, %v1916
    %v1918 = vpop.f32.mrb[0].mxu0
    %1919 = vdwg.mxu0
    %v1920 = vld [vmem:[#allocation13] sm:$0xff]
    %v1921 = vld [vmem:[#allocation13 + $0x8] sm:$0xff]
    %v1922 = vld [vmem:[#allocation13 + $0x10] sm:$0xff]
    %v1923 = vld [vmem:[#allocation13 + $0x18] sm:$0xff]
    %v1924 = vld [vmem:[#allocation16] sm:$0x1]
    %v1926 = vlaneseq
    %v1927 = vshrl.u32 %v1926, 7
    %v1928 = vsub.s32 0, %v1927
    %v1929 = vrot.slane %v1924, %v1928
    %v1932 = vsel %vm230, %v204, 0
    %1934 = vmatprep.subr.mxu0 0.0
    %1935 = vmatpush1.msra.mxu0 %v1920
    %1936 = vmatprep.subr.mxu0 0.0
    %1937 = vmatpush1.msra.mxu0 %v1921
    %1938 = vmatprep.subr.mxu0 0.0
    %1939 = vmatpush1.msra.mxu0 %v1922
    %1940 = vmatprep.subr.mxu0 0.0
    %1941 = vmatpush1.msra.mxu0 %v1923
    %1942 = vmatprep.subr.mxu0 0.0
    %1943 = vmatpush1.msra.mxu0 0.0
    %1944 = vmatprep.subr.mxu0 0.0
    %1945 = vmatpush1.msra.mxu0 0.0
    %1946 = vmatprep.subr.mxu0 0.0
    %1947 = vmatpush1.msra.mxu0 0.0
    %1948 = vmatprep.subr.mxu0 0.0
    %1949 = vmatpush1.msra.mxu0 0.0
    %1950 = vmatprep.subr.mxu0 0.0
    %1951 = vmatpush1.msra.mxu0 0.0
    %1952 = vmatprep.subr.mxu0 0.0
    %1953 = vmatpush1.msra.mxu0 0.0
    %1954 = vmatprep.subr.mxu0 0.0
    %1955 = vmatpush1.msra.mxu0 0.0
    %1956 = vmatprep.subr.mxu0 0.0
    %1957 = vmatpush1.msra.mxu0 0.0
    %1958 = vmatprep.subr.mxu0 0.0
    %1959 = vmatpush1.msra.mxu0 0.0
    %1960 = vmatprep.subr.mxu0 0.0
    %1961 = vmatpush1.msra.mxu0 0.0
    %1962 = vmatprep.subr.mxu0 0.0
    %1963 = vmatpush1.msra.mxu0 0.0
    %1964 = vmatprep.subr.mxu0 0.0
    %1965 = vmatpush1.msra.mxu0 0.0
    %1966 = vmatprep.subr.mxu0 0.0
    %1967 = vmatpush1.msra.mxu0 0.0
    %1968 = vmatprep.subr.mxu0 0.0
    %1969 = vmatpush1.msra.mxu0 0.0
    %1970 = vmatprep.subr.mxu0 0.0
    %1971 = vmatpush1.msra.mxu0 0.0
    %1972 = vmatprep.subr.mxu0 0.0
    %1973 = vmatpush1.msra.mxu0 0.0
    %1974 = vmatprep.subr.mxu0 0.0
    %1975 = vmatpush1.msra.mxu0 0.0
    %1976 = vmatprep.subr.mxu0 0.0
    %1977 = vmatpush1.msra.mxu0 0.0
    %1978 = vmatprep.subr.mxu0 0.0
    %1979 = vmatpush1.msra.mxu0 0.0
    %1980 = vmatprep.subr.mxu0 0.0
    %1981 = vmatpush1.msra.mxu0 0.0
    %1982 = vmatprep.subr.mxu0 0.0
    %1983 = vmatpush1.msra.mxu0 0.0
    %1984 = vmatprep.subr.mxu0 0.0
    %1985 = vmatpush1.msra.mxu0 0.0
    %1986 = vmatprep.subr.mxu0 0.0
    %1987 = vmatpush1.msra.mxu0 0.0
    %1988 = vmatprep.subr.mxu0 0.0
    %1989 = vmatpush1.msra.mxu0 0.0
    %1990 = vmatprep.subr.mxu0 0.0
    %1991 = vmatpush1.msra.mxu0 0.0
    %1992 = vmatprep.subr.mxu0 0.0
    %1993 = vmatpush1.msra.mxu0 0.0
    %1994 = vmatprep.subr.mxu0 0.0
    %1995 = vmatpush1.msra.mxu0 0.0
    %1996 = vmatprep.subr.mxu0 0.0
    %1997 = vmatpush1.msra.mxu0 0.0
    %1998 = vmatprep.mubr.f32.mxu0 0.0
    %1999 = vmatmul.mubr.f32.gmra.mrb[0].mxu0 %v1932
    %v2000 = vpop.f32.mrb[0].mxu0
    %v2001 = vadd.f32 %v1929, %v2000
    %v2002 = vpop.f32.mrb[0].mxu0
    %2003 = vdwg.mxu0
    %v2004 = vadd.f32 %v1917, %v2001
    %v2005 = vxor.u32 %v2004, 2147483648
    %v2006 = vmul.f32 %v2005, 1.442695
    %v2007 = vpow.pop %v2006
    %v2008 = vadd.f32 %v2007, 1.0
    %v2009 = vrcp.pop %v2008
    %v2010 = vmul.f32 1.0, %v2009
    %2012 = vrot.lane.b32.xlu0 %v2001, 64
    %v2013 = vpop.permute.xlu0 %2012
    %v2015 = vmul.f32 %v2010, %v2013
    %2017 = vrot.lane.b32.xlu0 %v2015, 64
    %v2018 = vpop.permute.xlu0 %2017
    %v2020 = vadd.f32 %v1917, %v2018
    %v2021 = vtanh.pop %v2020
    %v2022 = vsub.f32 1.0, %v2010
    %2024 = vrot.lane.b32.xlu0 %v2021, 96
    %v2025 = vpop.permute.xlu0 %2024
    %v2027 = vmul.f32 %v2022, %v2025
    %2028 = vrot.lane.b32.xlu0 %v204, 32
    %v2029 = vpop.permute.xlu0 %2028
    %v2031 = vmul.f32 %v2010, %v2029
    %v2032 = vadd.f32 %v2027, %v2031
    %v2033 = vld [vmem:[%s11] sm:$0xff]
    %v2034 = vld [vmem:[%s11 + $0x8] sm:$0xff]
    %v2035 = vld [vmem:[%s11 + $0x10] sm:$0xff]
    %v2036 = vld [vmem:[%s11 + $0x18] sm:$0xff]
    %v2037 = vld [vmem:[%s13] sm:$0x1]
    %v2039 = vlaneseq
    %v2040 = vshrl.u32 %v2039, 7
    %v2041 = vsub.s32 0, %v2040
    %v2042 = vrot.slane %v2037, %v2041
    %2045 = vrot.lane.b32.xlu0 %v2032, 96
    %v2046 = vpop.permute.xlu0 %2045
    %v2047 = vsel %vm230, %v2046, 0
    %2049 = vmatprep.subr.mxu0 0.0
    %2050 = vmatpush1.msra.mxu0 %v2033
    %2051 = vmatprep.subr.mxu0 0.0
    %2052 = vmatpush1.msra.mxu0 %v2034
    %2053 = vmatprep.subr.mxu0 0.0
    %2054 = vmatpush1.msra.mxu0 %v2035
    %2055 = vmatprep.subr.mxu0 0.0
    %2056 = vmatpush1.msra.mxu0 %v2036
    %2057 = vmatprep.subr.mxu0 0.0
    %2058 = vmatpush1.msra.mxu0 0.0
    %2059 = vmatprep.subr.mxu0 0.0
    %2060 = vmatpush1.msra.mxu0 0.0
    %2061 = vmatprep.subr.mxu0 0.0
    %2062 = vmatpush1.msra.mxu0 0.0
    %2063 = vmatprep.subr.mxu0 0.0
    %2064 = vmatpush1.msra.mxu0 0.0
    %2065 = vmatprep.subr.mxu0 0.0
    %2066 = vmatpush1.msra.mxu0 0.0
    %2067 = vmatprep.subr.mxu0 0.0
    %2068 = vmatpush1.msra.mxu0 0.0
    %2069 = vmatprep.subr.mxu0 0.0
    %2070 = vmatpush1.msra.mxu0 0.0
    %2071 = vmatprep.subr.mxu0 0.0
    %2072 = vmatpush1.msra.mxu0 0.0
    %2073 = vmatprep.subr.mxu0 0.0
    %2074 = vmatpush1.msra.mxu0 0.0
    %2075 = vmatprep.subr.mxu0 0.0
    %2076 = vmatpush1.msra.mxu0 0.0
    %2077 = vmatprep.subr.mxu0 0.0
    %2078 = vmatpush1.msra.mxu0 0.0
    %2079 = vmatprep.subr.mxu0 0.0
    %2080 = vmatpush1.msra.mxu0 0.0
    %2081 = vmatprep.subr.mxu0 0.0
    %2082 = vmatpush1.msra.mxu0 0.0
    %2083 = vmatprep.subr.mxu0 0.0
    %2084 = vmatpush1.msra.mxu0 0.0
    %2085 = vmatprep.subr.mxu0 0.0
    %2086 = vmatpush1.msra.mxu0 0.0
    %2087 = vmatprep.subr.mxu0 0.0
    %2088 = vmatpush1.msra.mxu0 0.0
    %2089 = vmatprep.subr.mxu0 0.0
    %2090 = vmatpush1.msra.mxu0 0.0
    %2091 = vmatprep.subr.mxu0 0.0
    %2092 = vmatpush1.msra.mxu0 0.0
    %2093 = vmatprep.subr.mxu0 0.0
    %2094 = vmatpush1.msra.mxu0 0.0
    %2095 = vmatprep.subr.mxu0 0.0
    %2096 = vmatpush1.msra.mxu0 0.0
    %2097 = vmatprep.subr.mxu0 0.0
    %2098 = vmatpush1.msra.mxu0 0.0
    %2099 = vmatprep.subr.mxu0 0.0
    %2100 = vmatpush1.msra.mxu0 0.0
    %2101 = vmatprep.subr.mxu0 0.0
    %2102 = vmatpush1.msra.mxu0 0.0
    %2103 = vmatprep.subr.mxu0 0.0
    %2104 = vmatpush1.msra.mxu0 0.0
    %2105 = vmatprep.subr.mxu0 0.0
    %2106 = vmatpush1.msra.mxu0 0.0
    %2107 = vmatprep.subr.mxu0 0.0
    %2108 = vmatpush1.msra.mxu0 0.0
    %2109 = vmatprep.subr.mxu0 0.0
    %2110 = vmatpush1.msra.mxu0 0.0
    %2111 = vmatprep.subr.mxu0 0.0
    %2112 = vmatpush1.msra.mxu0 0.0
    %2113 = vmatprep.mubr.f32.mxu0 0.0
    %2114 = vmatmul.mubr.f32.gmra.mrb[0].mxu0 %v2047
    %v2115 = vpop.f32.mrb[0].mxu0
    %v2116 = vadd.f32 %v2042, %v2115
    %v2117 = vpop.f32.mrb[0].mxu0
    %2118 = vdwg.mxu0
    %v2119 = vld [vmem:[#allocation17] sm:$0xff]
    %v2120 = vld [vmem:[#allocation17 + $0x8] sm:$0xff]
    %v2121 = vld [vmem:[#allocation17 + $0x10] sm:$0xff]
    %v2122 = vld [vmem:[#allocation17 + $0x18] sm:$0xff]
    %v2123 = vld [vmem:[%s14] sm:$0x1]
    %v2125 = vlaneseq
    %v2126 = vshrl.u32 %v2125, 7
    %v2127 = vsub.s32 0, %v2126
    %v2128 = vrot.slane %v2123, %v2127
    %v2131 = vsel %vm230, %v205, 0
    %2133 = vmatprep.subr.mxu0 0.0
    %2134 = vmatpush1.msra.mxu0 %v2119
    %2135 = vmatprep.subr.mxu0 0.0
    %2136 = vmatpush1.msra.mxu0 %v2120
    %2137 = vmatprep.subr.mxu0 0.0
    %2138 = vmatpush1.msra.mxu0 %v2121
    %2139 = vmatprep.subr.mxu0 0.0
    %2140 = vmatpush1.msra.mxu0 %v2122
    %2141 = vmatprep.subr.mxu0 0.0
    %2142 = vmatpush1.msra.mxu0 0.0
    %2143 = vmatprep.subr.mxu0 0.0
    %2144 = vmatpush1.msra.mxu0 0.0
    %2145 = vmatprep.subr.mxu0 0.0
    %2146 = vmatpush1.msra.mxu0 0.0
    %2147 = vmatprep.subr.mxu0 0.0
    %2148 = vmatpush1.msra.mxu0 0.0
    %2149 = vmatprep.subr.mxu0 0.0
    %2150 = vmatpush1.msra.mxu0 0.0
    %2151 = vmatprep.subr.mxu0 0.0
    %2152 = vmatpush1.msra.mxu0 0.0
    %2153 = vmatprep.subr.mxu0 0.0
    %2154 = vmatpush1.msra.mxu0 0.0
    %2155 = vmatprep.subr.mxu0 0.0
    %2156 = vmatpush1.msra.mxu0 0.0
    %2157 = vmatprep.subr.mxu0 0.0
    %2158 = vmatpush1.msra.mxu0 0.0
    %2159 = vmatprep.subr.mxu0 0.0
    %2160 = vmatpush1.msra.mxu0 0.0
    %2161 = vmatprep.subr.mxu0 0.0
    %2162 = vmatpush1.msra.mxu0 0.0
    %2163 = vmatprep.subr.mxu0 0.0
    %2164 = vmatpush1.msra.mxu0 0.0
    %2165 = vmatprep.subr.mxu0 0.0
    %2166 = vmatpush1.msra.mxu0 0.0
    %2167 = vmatprep.subr.mxu0 0.0
    %2168 = vmatpush1.msra.mxu0 0.0
    %2169 = vmatprep.subr.mxu0 0.0
    %2170 = vmatpush1.msra.mxu0 0.0
    %2171 = vmatprep.subr.mxu0 0.0
    %2172 = vmatpush1.msra.mxu0 0.0
    %2173 = vmatprep.subr.mxu0 0.0
    %2174 = vmatpush1.msra.mxu0 0.0
    %2175 = vmatprep.subr.mxu0 0.0
    %2176 = vmatpush1.msra.mxu0 0.0
    %2177 = vmatprep.subr.mxu0 0.0
    %2178 = vmatpush1.msra.mxu0 0.0
    %2179 = vmatprep.subr.mxu0 0.0
    %2180 = vmatpush1.msra.mxu0 0.0
    %2181 = vmatprep.subr.mxu0 0.0
    %2182 = vmatpush1.msra.mxu0 0.0
    %2183 = vmatprep.subr.mxu0 0.0
    %2184 = vmatpush1.msra.mxu0 0.0
    %2185 = vmatprep.subr.mxu0 0.0
    %2186 = vmatpush1.msra.mxu0 0.0
    %2187 = vmatprep.subr.mxu0 0.0
    %2188 = vmatpush1.msra.mxu0 0.0
    %2189 = vmatprep.subr.mxu0 0.0
    %2190 = vmatpush1.msra.mxu0 0.0
    %2191 = vmatprep.subr.mxu0 0.0
    %2192 = vmatpush1.msra.mxu0 0.0
    %2193 = vmatprep.subr.mxu0 0.0
    %2194 = vmatpush1.msra.mxu0 0.0
    %2195 = vmatprep.subr.mxu0 0.0
    %2196 = vmatpush1.msra.mxu0 0.0
    %2197 = vmatprep.mubr.f32.mxu0 0.0
    %2198 = vmatmul.mubr.f32.gmra.mrb[0].mxu0 %v2131
    %v2199 = vpop.f32.mrb[0].mxu0
    %v2200 = vadd.f32 %v2128, %v2199
    %v2201 = vpop.f32.mrb[0].mxu0
    %2202 = vdwg.mxu0
    %v2203 = vadd.f32 %v2116, %v2200
    %v2204 = vxor.u32 %v2203, 2147483648
    %v2205 = vmul.f32 %v2204, 1.442695
    %v2206 = vpow.pop %v2205
    %v2207 = vadd.f32 %v2206, 1.0
    %v2208 = vrcp.pop %v2207
    %v2209 = vmul.f32 1.0, %v2208
    %2211 = vrot.lane.b32.xlu0 %v2200, 64
    %v2212 = vpop.permute.xlu0 %2211
    %v2214 = vmul.f32 %v2209, %v2212
    %2216 = vrot.lane.b32.xlu0 %v2214, 64
    %v2217 = vpop.permute.xlu0 %2216
    %v2219 = vadd.f32 %v2116, %v2217
    %v2220 = vtanh.pop %v2219
    %v2221 = vsub.f32 1.0, %v2209
    %2223 = vrot.lane.b32.xlu0 %v2220, 96
    %v2224 = vpop.permute.xlu0 %2223
    %v2226 = vmul.f32 %v2221, %v2224
    %2227 = vrot.lane.b32.xlu0 %v205, 32
    %v2228 = vpop.permute.xlu0 %2227
    %v2230 = vmul.f32 %v2209, %v2228
    %v2231 = vadd.f32 %v2226, %v2230
    %2233 = vrot.lane.b32.xlu0 %v2231, 96
    %v2234 = vpop.permute.xlu0 %2233
    %2236 = vrot.lane.b32.xlu0 %v1821, 32
    %v2237 = vpop.permute.xlu0 %2236
    %2240 = vrot.lane.b32.xlu0 %v203, 64
    %v2241 = vpop.permute.xlu0 %2240
    %v2243 = vsel %vm230, %v2234, %v2237
    %v2244 = vsel %vm1825, %v2243, %v2241
    %v2245 = vld [vmem:[#allocation19] sm:$0xff]
    %v2246 = vld [vmem:[#allocation19 + $0x8] sm:$0xff]
    %v2247 = vld [vmem:[#allocation19 + $0x10] sm:$0xff]
    %v2248 = vld [vmem:[#allocation19 + $0x18] sm:$0xff]
    %v2249 = vld [vmem:[#allocation19 + $0x20] sm:$0xff]
    %v2250 = vld [vmem:[#allocation19 + $0x28] sm:$0xff]
    %v2251 = vld [vmem:[#allocation19 + $0x30] sm:$0xff]
    %v2252 = vld [vmem:[#allocation19 + $0x38] sm:$0xff]
    %v2253 = vld [vmem:[#allocation19 + $0x40] sm:$0xff]
    %v2254 = vld [vmem:[#allocation19 + $0x48] sm:$0xff]
    %v2255 = vld [vmem:[#allocation19 + $0x50] sm:$0xff]
    %v2256 = vld [vmem:[#allocation19 + $0x58] sm:$0xff]
    %v2257 = vld [vmem:[#allocation19 + $0x60] sm:$0xff]
    %v2258 = vld [vmem:[#allocation19 + $0x68] sm:$0xff]
    %v2259 = vld [vmem:[#allocation19 + $0x70] sm:$0xff]
    %v2260 = vld [vmem:[#allocation19 + $0x78] sm:$0xff]
    %v2261 = vld [vmem:[%s16] sm:$0x1]
    %v2263 = vlaneseq
    %v2264 = vshrl.u32 %v2263, 7
    %v2265 = vsub.s32 0, %v2264
    %v2266 = vrot.slane %v2261, %v2265
    %2268 = vmatprep.subr.mxu0 0.0
    %2269 = vmatpush1.msra.mxu0 %v2245
    %2270 = vmatprep.subr.mxu0 0.0
    %2271 = vmatpush1.msra.mxu0 %v2246
    %2272 = vmatprep.subr.mxu0 0.0
    %2273 = vmatpush1.msra.mxu0 %v2247
    %2274 = vmatprep.subr.mxu0 0.0
    %2275 = vmatpush1.msra.mxu0 %v2248
    %2276 = vmatprep.subr.mxu0 0.0
    %2277 = vmatpush1.msra.mxu0 %v2249
    %2278 = vmatprep.subr.mxu0 0.0
    %2279 = vmatpush1.msra.mxu0 %v2250
    %2280 = vmatprep.subr.mxu0 0.0
    %2281 = vmatpush1.msra.mxu0 %v2251
    %2282 = vmatprep.subr.mxu0 0.0
    %2283 = vmatpush1.msra.mxu0 %v2252
    %2284 = vmatprep.subr.mxu0 0.0
    %2285 = vmatpush1.msra.mxu0 %v2253
    %2286 = vmatprep.subr.mxu0 0.0
    %2287 = vmatpush1.msra.mxu0 %v2254
    %2288 = vmatprep.subr.mxu0 0.0
    %2289 = vmatpush1.msra.mxu0 %v2255
    %2290 = vmatprep.subr.mxu0 0.0
    %2291 = vmatpush1.msra.mxu0 %v2256
    %2292 = vmatprep.subr.mxu0 0.0
    %2293 = vmatpush1.msra.mxu0 %v2257
    %2294 = vmatprep.subr.mxu0 0.0
    %2295 = vmatpush1.msra.mxu0 %v2258
    %2296 = vmatprep.subr.mxu0 0.0
    %2297 = vmatpush1.msra.mxu0 %v2259
    %2298 = vmatprep.subr.mxu0 0.0
    %2299 = vmatpush1.msra.mxu0 %v2260
    %2300 = vmatprep.subr.mxu0 0.0
    %2301 = vmatpush1.msra.mxu0 0.0
    %2302 = vmatprep.subr.mxu0 0.0
    %2303 = vmatpush1.msra.mxu0 0.0
    %2304 = vmatprep.subr.mxu0 0.0
    %2305 = vmatpush1.msra.mxu0 0.0
    %2306 = vmatprep.subr.mxu0 0.0
    %2307 = vmatpush1.msra.mxu0 0.0
    %2308 = vmatprep.subr.mxu0 0.0
    %2309 = vmatpush1.msra.mxu0 0.0
    %2310 = vmatprep.subr.mxu0 0.0
    %2311 = vmatpush1.msra.mxu0 0.0
    %2312 = vmatprep.subr.mxu0 0.0
    %2313 = vmatpush1.msra.mxu0 0.0
    %2314 = vmatprep.subr.mxu0 0.0
    %2315 = vmatpush1.msra.mxu0 0.0
    %2316 = vmatprep.subr.mxu0 0.0
    %2317 = vmatpush1.msra.mxu0 0.0
    %2318 = vmatprep.subr.mxu0 0.0
    %2319 = vmatpush1.msra.mxu0 0.0
    %2320 = vmatprep.subr.mxu0 0.0
    %2321 = vmatpush1.msra.mxu0 0.0
    %2322 = vmatprep.subr.mxu0 0.0
    %2323 = vmatpush1.msra.mxu0 0.0
    %2324 = vmatprep.subr.mxu0 0.0
    %2325 = vmatpush1.msra.mxu0 0.0
    %2326 = vmatprep.subr.mxu0 0.0
    %2327 = vmatpush1.msra.mxu0 0.0
    %2328 = vmatprep.subr.mxu0 0.0
    %2329 = vmatpush1.msra.mxu0 0.0
    %2330 = vmatprep.subr.mxu0 0.0
    %2331 = vmatpush1.msra.mxu0 0.0
    %2332 = vmatprep.mubr.f32.mxu0 0.0
    %2333 = vmatmul.mubr.f32.gmra.mrb[0].mxu0 %v2244
    %v2334 = vpop.f32.mrb[0].mxu0
    %v2335 = vadd.f32 %v2266, %v2334
    %v2336 = vpop.f32.mrb[0].mxu0
    %2337 = vdwg.mxu0
    %2338 = vst [vmem:[#allocation20] sm:$0xff] %v2335
    %2340 = vst.msk [vmem:[#allocation21] sm:$0xff] %vm230, %v2046
    %2341 = vst.msk [vmem:[#allocation21 + $0x8] sm:$0xff] %vm230, %v2234
    // Predicated region
    $region114: #{tpu_custom_call.1} parent=1 // pred_check
      _
    $region115: #{tpu_custom_call.1} parent=1 // pred_check_branch
      %2343 = sbr.rel (0) target = $region117
    $region116: #{tpu_custom_call.1} parent=1 // pred_region
      %s2345 = ssub.s32 128, 128
      %2346 = vsyncadd [#allocation4], %s2345
      %s2348 = sshll.u32 [#allocation20], 4
      %s2349 = int_to_ptr.vmem [resolvable:$true] %s2348
      %2351 = dma.vmem_to_hbm [thread:$0]  %s2349, 128, %s17, [#allocation4]
    $region117: #{tpu_custom_call.1} parent=1 // pred_fallthru
      _
    // Predicated region
    $region118: #{tpu_custom_call.1} parent=1 // pred_check
      _
    $region119: #{tpu_custom_call.1} parent=1 // pred_check_branch
      %2353 = sbr.rel (0) target = $region121
    $region120: #{tpu_custom_call.1} parent=1 // pred_region
      %s2355 = ssub.s32 256, 256
      %2356 = vsyncadd [#allocation22], %s2355
      %s2357 = sshll.u32 [#allocation21], 4
      %s2358 = int_to_ptr.vmem [resolvable:$true] %s2357
      %2363 = dma.vmem_to_hbm [thread:$0]  %s2358, 256, %s18, [#allocation22], 128, 128, 8
    $region121: #{tpu_custom_call.1} parent=1 // pred_fallthru
      _
    // Predicated region
    $region122: #{tpu_custom_call.1} parent=1 // pred_check
      _
    $region123: #{tpu_custom_call.1} parent=1 // pred_check_branch
      %2365 = sbr.rel (0) target = $region125
    $region124: #{tpu_custom_call.1} parent=1 // pred_region
      %2366 = dma.done [#allocation4], 128
    $region125: #{tpu_custom_call.1} parent=1 // pred_fallthru
      _
    // Predicated region
    $region126: #{tpu_custom_call.1} parent=1 // pred_check
      _
    $region127: #{tpu_custom_call.1} parent=1 // pred_check_branch
      %2368 = sbr.rel (0) target = $region129
    $region128: #{tpu_custom_call.1} parent=1 // pred_region
      %2369 = dma.done [#allocation22], 256
    $region129: #{tpu_custom_call.1} parent=1 // pred_fallthru
      _
    %2370 = vsyncpa [#allocation3], 1
    %2371 = vsyncpa [#allocation6], 1
    %2372 = vsyncpa [#allocation9], 1
    %2373 = vsyncpa [#allocation12], 1
    %2374 = vsyncpa [#allocation15], 1
    %2375 = vsyncpa [#allocation18], 1
    %2376 = vsyncpa [#allocation4], 1
    %2377 = vsyncpa [#allocation22], 1

</llo_original>
